<compile_context>
chip_gen: v5e
topology: v5e:2x2
jax: 0.10.0
libtpu: 0.0.40
codegen_flags: <defaults>
</compile_context>

<pallas_src>
import jax
import jax.numpy as jnp
from jax import lax
from jax.experimental import pallas as pl
from jax.experimental.pallas import tpu as pltpu  # noqa: F401  (TPU backend)

EPS = 1e-12      # F.normalize eps
NEG_INF = -1e32  # masked_fill value
POS_BIG = 1e32   # "no cap" value for unmasked keys


# ----------------------------------------------------------------------------
# Kernel factory: all sizes are static Python ints captured by the closure.
# ----------------------------------------------------------------------------
def _make_find_kernel(B, Lq, Li, Lk, Dq, Dk, mid, H):
    two_mid = 2 * mid
    two_h = 2 * H

    # Row offsets of the blocks inside the packed weight arrays.
    wa_heights = (Dq, Dk, Dk, Dq, H, H)
    wa_off = []
    off = 0
    for h_rows in wa_heights:
        wa_off.append(off)
        off += h_rows
    o_wq1, o_wki1, o_wkk1, o_wg1q, o_wg1h, o_wh1 = wa_off

    def inv_l2_axis0(x):
        # 1 / max(||x||_2 over the sequence/node axis, eps): single EUP rsqrt.
        ss = jnp.sum(x * x, axis=0, keepdims=True)
        return lax.rsqrt(jnp.maximum(ss, jnp.float32(EPS * EPS)))

    def dot_t(a, b):
        # a @ b.T without an explicit transpose (contract the feature axis).
        return lax.dot_general(a, b, (((1,), (1,)), ((), ())),
                               preferred_element_type=jnp.float32)

    def mlp(x, w1, b1, w2, b2):
        h = jnp.maximum(jnp.dot(x, w1, preferred_element_type=jnp.float32) + b1, 0.0)
        return jnp.dot(h, w2, preferred_element_type=jnp.float32) + b2

    def kernel(query_ref, img_ref, kg_ref, cap_ref, wa_ref, wb_ref, b_ref,
               img_map_ref, kg_map_ref, all_map_ref, node_re_ref):
        # ---- unpack weights (static slices of the 3 packed operands) -------
        Wq1 = wa_ref[o_wq1:o_wq1 + Dq, :]        # [Dq, 2mid]  fqi_q.W1 | fqk_q.W1
        Wki1 = wa_ref[o_wki1:o_wki1 + Dk, :]     # [Dk, 2mid]  fqi_k.W1 | key.W1
        Wkk1 = wa_ref[o_wkk1:o_wkk1 + Dk, :]     # [Dk, 2mid]  fqk_k.W1 | key.W1
        Wg1q = wa_ref[o_wg1q:o_wg1q + Dq, :]     # [Dq, 2mid]  img_gate.W1 | kg_gate.W1[:Dq]
        Wg1h = wa_ref[o_wg1h:o_wg1h + H, :]      # [H , 2mid]  0 | kg_gate.W1[Dq:]
        Wh1 = wa_ref[o_wh1:o_wh1 + H, :]         # [H , 2mid]  hid.W1 | 0

        Wq2 = wb_ref[0 * two_mid:1 * two_mid, :]   # [2mid, 2H] blockdiag(fqi_q.W2, fqk_q.W2)
        Wki2 = wb_ref[1 * two_mid:2 * two_mid, :]  # [2mid, 2H] blockdiag(fqi_k.W2, key.W2)
        Wkk2 = wb_ref[2 * two_mid:3 * two_mid, :]  # [2mid, 2H] blockdiag(fqk_k.W2, key.W2)
        Wg2 = wb_ref[3 * two_mid:4 * two_mid, :]   # [2mid, 2H] col0=img_gate.W2, col1=kg_gate.W2
        Wh2 = wb_ref[4 * two_mid:5 * two_mid, :]   # [2mid, 2H] top-left = hid.W2

        bq1 = b_ref[0:1, :two_mid]
        bq2 = b_ref[1:2, :two_h]
        bki1 = b_ref[2:3, :two_mid]
        bki2 = b_ref[3:4, :two_h]
        bkk1 = b_ref[4:5, :two_mid]
        bkk2 = b_ref[5:6, :two_h]
        bg1 = b_ref[6:7, :two_mid]
        bg2 = b_ref[7:8, :two_h]
        bh1 = b_ref[8:9, :two_mid]
        bh2 = b_ref[9:10, :two_h]

        # ---- Stage A: batch-folded fused MLPs (one pass over [B*L, D]) -----
        q_flat = query_ref[...].reshape(B * Lq, Dq)
        img_flat = img_ref[...].reshape(B * Li, Dk)
        kg_flat = kg_ref[...].reshape(B * Lk, Dk)

        q_both = mlp(q_flat, Wq1, bq1, Wq2, bq2)     # [B*Lq, 2H] : fqi_q | fqk_q
        i_both = mlp(img_flat, Wki1, bki1, Wki2, bki2)  # [B*Li, 2H] : find-key | match-node
        k_both = mlp(kg_flat, Wkk1, bkk1, Wkk2, bkk2)   # [B*Lk, 2H] : find-key | match-node

        # ---- Stage B: per-batch Find attentions (value only; maps unused) --
        def find_value(qn, kn, cap_row):
            s = dot_t(qn, kn)                     # [Lq, Lkey]
            s = jnp.minimum(s, cap_row)           # masked_fill(mask==1, -1e32)
            # softmax over dim=1 of [B, Lq, Lkey] -> axis 0 of the per-batch tile
            smax = jnp.max(s, axis=0, keepdims=True)
            e = jnp.exp(s - smax)
            att = e * pl.reciprocal(jnp.sum(e, axis=0, keepdims=True), approx=True)
            return jnp.dot(att, kn, preferred_element_type=jnp.float32)   # [Lq, H]

        lang_img_rows, lang_kg_rows = [], []
        for b in range(B):                        # B tiny & static -> unrolled
            cap_b = cap_ref[b]                    # [1, Li+Lk]
            qh_i = q_both[b * Lq:(b + 1) * Lq, :H]
            qh_k = q_both[b * Lq:(b + 1) * Lq, H:]
            kh_i = i_both[b * Li:(b + 1) * Li, :H]
            kh_k = k_both[b * Lk:(b + 1) * Lk, :H]
            qn_i = qh_i * inv_l2_axis0(qh_i)      # F.normalize(p=2, dim=1)
            qn_k = qh_k * inv_l2_axis0(qh_k)
            kn_i = kh_i * inv_l2_axis0(kh_i)
            kn_k = kh_k * inv_l2_axis0(kh_k)
            lang_img_rows.append(find_value(qn_i, kn_i, cap_b[:, :Li]))
            lang_kg_rows.append(find_value(qn_k, kn_k, cap_b[:, Li:]))
        lang_img_all = jnp.concatenate(lang_img_rows, axis=0)   # [B*Lq, H]
        lang_kg_all = jnp.concatenate(lang_kg_rows, axis=0)     # [B*Lq, H]

        # ---- Stage C: batched gates + fusion + hidden MLP -------------------
        # TODO(synk): reference cats query with lang_*_re along dim=0 (shape-
        # inconsistent with the gates' declared in_size); gates fed sizes that
        # match __init__: img gate gets query, kg gate gets cat([query, lang_kg], -1)
        # (implemented as fused/padded dots — no concat needed).
        pre = (jnp.dot(q_flat, Wg1q, preferred_element_type=jnp.float32) + bg1
               + jnp.dot(lang_kg_all, Wg1h, preferred_element_type=jnp.float32))
        hgate = jnp.maximum(pre, 0.0)                                   # [B*Lq, 2mid]
        gscore = jnp.dot(hgate, Wg2, preferred_element_type=jnp.float32) + bg2
        s_img = gscore[:, 0:1]                                          # [B*Lq, 1]
        s_kg = gscore[:, 1:2]                                           # [B*Lq, 1]

        # softmax over the two gate scores per token; convex combination
        gmax = jnp.maximum(s_img, s_kg)
        ei = jnp.exp(s_img - gmax)
        ek = jnp.exp(s_kg - gmax)
        zinv = pl.reciprocal(ei + ek, approx=True)
        node_gated = (ei * zinv) * lang_img_all + (ek * zinv) * lang_kg_all   # [B*Lq, H]

        hh = jnp.maximum(
            jnp.dot(node_gated, Wh1, preferred_element_type=jnp.float32) + bh1, 0.0)
        hid_all = (jnp.dot(hh, Wh2, preferred_element_type=jnp.float32) + bh2)[:, :H]

        # ---- Stage D: per-batch Match attention + outputs -------------------
        for b in range(B):
            hid_b = hid_all[b * Lq:(b + 1) * Lq, :]                     # [Lq, H]
            # in-VMEM row concat of the img/kg match-node reps and raw features
            n_b = jnp.concatenate(
                [i_both[b * Li:(b + 1) * Li, H:],
                 k_both[b * Lk:(b + 1) * Lk, H:]], axis=0)              # [Li+Lk, H]
            nodes_raw = jnp.concatenate([img_ref[b], kg_ref[b]], axis=0)  # [Li+Lk, Dk]

            hid_n = hid_b * inv_l2_axis0(hid_b)
            n_n = n_b * inv_l2_axis0(n_b)        # joint L2 norm over img++kg node axis

            s = dot_t(hid_n, n_n)                # [Lq, Li+Lk]
            # TODO(synk): reference calls F.softmax without dim (ambiguous/legacy);
            # softmax taken jointly over the node axis (Li + Lk).
            rmax = jnp.max(s, axis=-1, keepdims=True)
            e = jnp.exp(s - rmax)
            att = e * pl.reciprocal(jnp.sum(e, axis=-1, keepdims=True), approx=True)

            # TODO(synk): reference slices all_node_map[:num_obj] / [num_obj:num_kg]
            # along the batch axis (buggy); slice along the node axis instead.
            all_map_ref[b] = att
            img_map_ref[b] = att[:, :Li]
            kg_map_ref[b] = att[:, Li:]
            # node_re = att @ cat([img, kg], node axis)
            node_re_ref[b] = jnp.dot(att, nodes_raw,
                                     preferred_element_type=jnp.float32)

    return kernel


# ----------------------------------------------------------------------------
# One-time parameter packing (done at parameter-prep, NOT per call):
#   wa: first-layer / 32-row weights, wb: block-diag second layers, bb: biases.
# ----------------------------------------------------------------------------
def pack_find_params(params):
    fqi_q_w1, fqi_q_b1, fqi_q_w2, fqi_q_b2 = params["fqi_qmlp"]
    fqi_k_w1, fqi_k_b1, fqi_k_w2, fqi_k_b2 = params["fqi_kmlp"]
    fqk_q_w1, fqk_q_b1, fqk_q_w2, fqk_q_b2 = params["fqk_qmlp"]
    fqk_k_w1, fqk_k_b1, fqk_k_w2, fqk_k_b2 = params["fqk_kmlp"]
    gkg_w1, gkg_b1, gkg_w2, gkg_b2 = params["m_qkg_gate"]
    gim_w1, gim_b1, gim_w2, gim_b2 = params["m_qimg_gate"]
    hid_w1, hid_b1, hid_w2, hid_b2 = params["m_hidden"]
    key_w1, key_b1, key_w2, key_b2 = params["m_key"]

    Dq = fqi_q_w1.shape[0]
    mid = fqi_q_w1.shape[1]
    H = fqi_q_w2.shape[1]
    two_mid, two_h = 2 * mid, 2 * H

    def pad_cols(w, total, off=0):
        out = jnp.zeros((w.shape[0], total), jnp.float32)
        return out.at[:, off:off + w.shape[1]].set(w)

    def block_diag(a, b):
        out = jnp.zeros((a.shape[0] + b.shape[0], a.shape[1] + b.shape[1]),
                        jnp.float32)
        out = out.at[:a.shape[0], :a.shape[1]].set(a)
        out = out.at[a.shape[0]:, a.shape[1]:].set(b)
        return out

    gkg_w1q, gkg_w1h = gkg_w1[:Dq], gkg_w1[Dq:]     # split of the kg gate's W1

    wa = jnp.concatenate([
        jnp.concatenate([fqi_q_w1, fqk_q_w1], axis=1),   # Wq1
        jnp.concatenate([fqi_k_w1, key_w1], axis=1),     # Wki1
        jnp.concatenate([fqk_k_w1, key_w1], axis=1),     # Wkk1
        jnp.concatenate([gim_w1, gkg_w1q], axis=1),      # Wg1q
        pad_cols(gkg_w1h, two_mid, off=mid),             # Wg1h (kg-gate half)
        pad_cols(hid_w1, two_mid, off=0),                # Wh1  (first half)
    ], axis=0)

    wg2 = jnp.zeros((two_mid, two_h), jnp.float32)
    wg2 = wg2.at[:mid, 0:1].set(gim_w2)
    wg2 = wg2.at[mid:, 1:2].set(gkg_w2)
    wh2 = jnp.zeros((two_mid, two_h), jnp.float32)
    wh2 = wh2.at[:mid, :H].set(hid_w2)

    wb = jnp.concatenate([
        block_diag(fqi_q_w2, fqk_q_w2),
        block_diag(fqi_k_w2, key_w2),
        block_diag(fqk_k_w2, key_w2),
        wg2,
        wh2,
    ], axis=0)

    bw = max(two_mid, two_h)

    def brow(*pieces):
        row = jnp.concatenate([p.reshape(1, -1) for p in pieces], axis=1)
        return pad_cols(row, bw, off=0)

    bb = jnp.concatenate([
        brow(fqi_q_b1, fqk_q_b1),
        brow(fqi_q_b2, fqk_q_b2),
        brow(fqi_k_b1, key_b1),
        brow(fqi_k_b2, key_b2),
        brow(fqk_k_b1, key_b1),
        brow(fqk_k_b2, key_b2),
        brow(gim_b1, gkg_b1),
        brow(gim_b2, gkg_b2),
        brow(hid_b1),
        brow(hid_b2),
    ], axis=0)

    return wa, wb, bb


# ----------------------------------------------------------------------------
# Wrapper: one pallas_call, 7 operands, 4 outputs, no post-kernel XLA ops.
# ----------------------------------------------------------------------------
def find_forward(packed, query, img, kg, img_mask, kg_mask):
    wa, wb, bb = packed
    B, Lq, Dq = query.shape
    _, Li, Dk = img.shape
    _, Lk, _ = kg.shape
    mid = wa.shape[1] // 2
    H = wb.shape[1] // 2

    # masked_fill(mask==1, -1e32) as a per-key-position cap: min(score, cap).
    # cap = +1e32 where unmasked (no-op), -1e32 where masked (exact fill value).
    mask_cat = jnp.concatenate([img_mask.astype(jnp.float32),
                                kg_mask.astype(jnp.float32)], axis=-1)
    cap = (jnp.float32(POS_BIG)
           - jnp.float32(2.0 * POS_BIG) * mask_cat).reshape(B, 1, Li + Lk)

    kernel = _make_find_kernel(B, Lq, Li, Lk, Dq, Dk, mid, H)

    out_shapes = (
        jax.ShapeDtypeStruct((B, Lq, Li), jnp.float32),
        jax.ShapeDtypeStruct((B, Lq, Lk), jnp.float32),
        jax.ShapeDtypeStruct((B, Lq, Li + Lk), jnp.float32),
        jax.ShapeDtypeStruct((B, Lq, Dk), jnp.float32),
    )
    img_map, kg_map, all_map, node_re = pl.pallas_call(
        kernel,
        out_shape=out_shapes,
    )(query, img, kg, cap, wa, wb, bb)
    return img_map, kg_map, all_map, node_re


# ----------------------------------------------------------------------------
# Deterministic parameter init (synthetic; no checkpoint loading)
# ----------------------------------------------------------------------------
def init_mlp(key, din, dmid, dout):
    k1, k2 = jax.random.split(key)
    w1 = jax.random.normal(k1, (din, dmid), jnp.float32) / jnp.sqrt(jnp.float32(din))
    b1 = jnp.zeros((1, dmid), jnp.float32)
    w2 = jax.random.normal(k2, (dmid, dout), jnp.float32) / jnp.sqrt(jnp.float32(dmid))
    b2 = jnp.zeros((1, dout), jnp.float32)
    return (w1, b1, w2, b2)


if __name__ == "__main__":
    B, Lq, Li, Lk = 2, 8, 8, 8
    query_size, key_size, mid, hidden = 32, 32, 32, 32

    root = jax.random.PRNGKey(0)
    keys = jax.random.split(root, 16)

    params = {
        "fqi_qmlp": init_mlp(keys[0], query_size, mid, hidden),
        "fqi_kmlp": init_mlp(keys[1], key_size, mid, hidden),
        "fqk_qmlp": init_mlp(keys[2], query_size, mid, hidden),
        "fqk_kmlp": init_mlp(keys[3], key_size, mid, hidden),
        "m_qkg_gate": init_mlp(keys[4], query_size + hidden, mid, 1),
        "m_qimg_gate": init_mlp(keys[5], query_size, mid, 1),
        "m_hidden": init_mlp(keys[6], hidden, mid, hidden),
        "m_key": init_mlp(keys[7], key_size, mid, hidden),
    }
    # One-time parameter packing (weight split / column-stack / block-diag).
    packed = pack_find_params(params)

    query = jax.random.normal(keys[8], (B, Lq, query_size), jnp.float32)
    img = jax.random.normal(keys[9], (B, Li, key_size), jnp.float32)
    kg = jax.random.normal(keys[10], (B, Lk, key_size), jnp.float32)
    img_mask = (jax.random.uniform(keys[11], (B, Li)) > 0.8).astype(jnp.float32)
    kg_mask = (jax.random.uniform(keys[12], (B, Lk)) > 0.8).astype(jnp.float32)

    fwd = jax.jit(find_forward)
    outs = fwd(packed, query, img, kg, img_mask, kg_mask)
    jax.block_until_ready(outs)
    img_map, kg_map, all_map, node_re = outs

    assert img_map.shape == (B, Lq, Li)
    assert kg_map.shape == (B, Lq, Lk)
    assert all_map.shape == (B, Lq, Li + Lk)
    assert node_re.shape == (B, Lq, key_size)
    assert bool(jnp.all(jnp.isfinite(img_map)))
    assert bool(jnp.all(jnp.isfinite(kg_map)))
    assert bool(jnp.all(jnp.isfinite(all_map)))
    assert bool(jnp.all(jnp.isfinite(node_re)))
    print("KERNEL_OK")
</pallas_src>

<mosaic_0001>
module attributes {stable_mosaic.version = 11 : i64} {
  func.func @kernel(%arg0: memref<2x8x32xf32, #tpu.memory_space<vmem>>, %arg1: memref<2x8x32xf32, #tpu.memory_space<vmem>>, %arg2: memref<2x8x32xf32, #tpu.memory_space<vmem>>, %arg3: memref<2x1x16xf32, #tpu.memory_space<vmem>>, %arg4: memref<192x64xf32, #tpu.memory_space<vmem>>, %arg5: memref<320x64xf32, #tpu.memory_space<vmem>>, %arg6: memref<10x64xf32, #tpu.memory_space<vmem>>, %arg7: memref<2x8x8xf32, #tpu.memory_space<vmem>>, %arg8: memref<2x8x8xf32, #tpu.memory_space<vmem>>, %arg9: memref<2x8x16xf32, #tpu.memory_space<vmem>>, %arg10: memref<2x8x32xf32, #tpu.memory_space<vmem>>) attributes {dimension_semantics = [], scalar_prefetch = 0 : i64, scratch_operands = 0 : i64, tpu.core_type = #tpu.core_type<tc>} {
    %c0 = arith.constant 0 : index
    %c0_0 = arith.constant 0 : index
    %0 = vector.load %arg4[%c0, %c0_0] : memref<192x64xf32, #tpu.memory_space<vmem>>, vector<32x64xf32>
    %c32 = arith.constant 32 : index
    %c0_1 = arith.constant 0 : index
    %1 = vector.load %arg4[%c32, %c0_1] : memref<192x64xf32, #tpu.memory_space<vmem>>, vector<32x64xf32>
    %c64 = arith.constant 64 : index
    %c0_2 = arith.constant 0 : index
    %2 = vector.load %arg4[%c64, %c0_2] : memref<192x64xf32, #tpu.memory_space<vmem>>, vector<32x64xf32>
    %c96 = arith.constant 96 : index
    %c0_3 = arith.constant 0 : index
    %3 = vector.load %arg4[%c96, %c0_3] : memref<192x64xf32, #tpu.memory_space<vmem>>, vector<32x64xf32>
    %c128 = arith.constant 128 : index
    %c0_4 = arith.constant 0 : index
    %4 = vector.load %arg4[%c128, %c0_4] : memref<192x64xf32, #tpu.memory_space<vmem>>, vector<32x64xf32>
    %c160 = arith.constant 160 : index
    %c0_5 = arith.constant 0 : index
    %5 = vector.load %arg4[%c160, %c0_5] : memref<192x64xf32, #tpu.memory_space<vmem>>, vector<32x64xf32>
    %c0_6 = arith.constant 0 : index
    %c0_7 = arith.constant 0 : index
    %6 = vector.load %arg5[%c0_6, %c0_7] : memref<320x64xf32, #tpu.memory_space<vmem>>, vector<64x64xf32>
    %c64_8 = arith.constant 64 : index
    %c0_9 = arith.constant 0 : index
    %7 = vector.load %arg5[%c64_8, %c0_9] : memref<320x64xf32, #tpu.memory_space<vmem>>, vector<64x64xf32>
    %c128_10 = arith.constant 128 : index
    %c0_11 = arith.constant 0 : index
    %8 = vector.load %arg5[%c128_10, %c0_11] : memref<320x64xf32, #tpu.memory_space<vmem>>, vector<64x64xf32>
    %c192 = arith.constant 192 : index
    %c0_12 = arith.constant 0 : index
    %9 = vector.load %arg5[%c192, %c0_12] : memref<320x64xf32, #tpu.memory_space<vmem>>, vector<64x64xf32>
    %c256 = arith.constant 256 : index
    %c0_13 = arith.constant 0 : index
    %10 = vector.load %arg5[%c256, %c0_13] : memref<320x64xf32, #tpu.memory_space<vmem>>, vector<64x64xf32>
    %c0_14 = arith.constant 0 : index
    %c0_15 = arith.constant 0 : index
    %11 = vector.load %arg6[%c0_14, %c0_15] : memref<10x64xf32, #tpu.memory_space<vmem>>, vector<1x64xf32>
    %c1 = arith.constant 1 : index
    %c0_16 = arith.constant 0 : index
    %12 = vector.load %arg6[%c1, %c0_16] : memref<10x64xf32, #tpu.memory_space<vmem>>, vector<1x64xf32>
    %c2 = arith.constant 2 : index
    %c0_17 = arith.constant 0 : index
    %13 = vector.load %arg6[%c2, %c0_17] : memref<10x64xf32, #tpu.memory_space<vmem>>, vector<1x64xf32>
    %c3 = arith.constant 3 : index
    %c0_18 = arith.constant 0 : index
    %14 = vector.load %arg6[%c3, %c0_18] : memref<10x64xf32, #tpu.memory_space<vmem>>, vector<1x64xf32>
    %c4 = arith.constant 4 : index
    %c0_19 = arith.constant 0 : index
    %15 = vector.load %arg6[%c4, %c0_19] : memref<10x64xf32, #tpu.memory_space<vmem>>, vector<1x64xf32>
    %c5 = arith.constant 5 : index
    %c0_20 = arith.constant 0 : index
    %16 = vector.load %arg6[%c5, %c0_20] : memref<10x64xf32, #tpu.memory_space<vmem>>, vector<1x64xf32>
    %c6 = arith.constant 6 : index
    %c0_21 = arith.constant 0 : index
    %17 = vector.load %arg6[%c6, %c0_21] : memref<10x64xf32, #tpu.memory_space<vmem>>, vector<1x64xf32>
    %c7 = arith.constant 7 : index
    %c0_22 = arith.constant 0 : index
    %18 = vector.load %arg6[%c7, %c0_22] : memref<10x64xf32, #tpu.memory_space<vmem>>, vector<1x64xf32>
    %c8 = arith.constant 8 : index
    %c0_23 = arith.constant 0 : index
    %19 = vector.load %arg6[%c8, %c0_23] : memref<10x64xf32, #tpu.memory_space<vmem>>, vector<1x64xf32>
    %c9 = arith.constant 9 : index
    %c0_24 = arith.constant 0 : index
    %20 = vector.load %arg6[%c9, %c0_24] : memref<10x64xf32, #tpu.memory_space<vmem>>, vector<1x64xf32>
    %c0_25 = arith.constant 0 : index
    %c0_26 = arith.constant 0 : index
    %c0_27 = arith.constant 0 : index
    %21 = vector.load %arg0[%c0_25, %c0_26, %c0_27] : memref<2x8x32xf32, #tpu.memory_space<vmem>>, vector<2x8x32xf32>
    %22 = vector.shape_cast %21 : vector<2x8x32xf32> to vector<16x32xf32>
    %c0_28 = arith.constant 0 : index
    %c0_29 = arith.constant 0 : index
    %c0_30 = arith.constant 0 : index
    %23 = vector.load %arg1[%c0_28, %c0_29, %c0_30] : memref<2x8x32xf32, #tpu.memory_space<vmem>>, vector<2x8x32xf32>
    %24 = vector.shape_cast %23 : vector<2x8x32xf32> to vector<16x32xf32>
    %c0_31 = arith.constant 0 : index
    %c0_32 = arith.constant 0 : index
    %c0_33 = arith.constant 0 : index
    %25 = vector.load %arg2[%c0_31, %c0_32, %c0_33] : memref<2x8x32xf32, #tpu.memory_space<vmem>>, vector<2x8x32xf32>
    %26 = vector.shape_cast %25 : vector<2x8x32xf32> to vector<16x32xf32>
    %cst = arith.constant dense<0.000000e+00> : vector<16x64xf32>
    %27 = tpu.matmul %22, %0, %cst {dimension_numbers = #tpu.dot_dimension_numbers<[1], [0], [0], [1], [0, 0, 1, 1], [], []>} : vector<16x32xf32>, vector<32x64xf32>, vector<16x64xf32> -> vector<16x64xf32>
    %28 = vector.broadcast %11 : vector<1x64xf32> to vector<16x64xf32>
    %29 = arith.addf %27, %28 : vector<16x64xf32>
    %cst_34 = arith.constant 0.000000e+00 : f32
    %30 = vector.broadcast %cst_34 : f32 to vector<16x64xf32>
    %31 = arith.maximumf %29, %30 : vector<16x64xf32>
    %cst_35 = arith.constant dense<0.000000e+00> : vector<16x64xf32>
    %32 = tpu.matmul %31, %6, %cst_35 {dimension_numbers = #tpu.dot_dimension_numbers<[1], [0], [0], [1], [0, 0, 1, 1], [], []>} : vector<16x64xf32>, vector<64x64xf32>, vector<16x64xf32> -> vector<16x64xf32>
    %33 = vector.broadcast %12 : vector<1x64xf32> to vector<16x64xf32>
    %34 = arith.addf %32, %33 : vector<16x64xf32>
    %cst_36 = arith.constant dense<0.000000e+00> : vector<16x64xf32>
    %35 = tpu.matmul %24, %1, %cst_36 {dimension_numbers = #tpu.dot_dimension_numbers<[1], [0], [0], [1], [0, 0, 1, 1], [], []>} : vector<16x32xf32>, vector<32x64xf32>, vector<16x64xf32> -> vector<16x64xf32>
    %36 = vector.broadcast %13 : vector<1x64xf32> to vector<16x64xf32>
    %37 = arith.addf %35, %36 : vector<16x64xf32>
    %cst_37 = arith.constant 0.000000e+00 : f32
    %38 = vector.broadcast %cst_37 : f32 to vector<16x64xf32>
    %39 = arith.maximumf %37, %38 : vector<16x64xf32>
    %cst_38 = arith.constant dense<0.000000e+00> : vector<16x64xf32>
    %40 = tpu.matmul %39, %7, %cst_38 {dimension_numbers = #tpu.dot_dimension_numbers<[1], [0], [0], [1], [0, 0, 1, 1], [], []>} : vector<16x64xf32>, vector<64x64xf32>, vector<16x64xf32> -> vector<16x64xf32>
    %41 = vector.broadcast %14 : vector<1x64xf32> to vector<16x64xf32>
    %42 = arith.addf %40, %41 : vector<16x64xf32>
    %cst_39 = arith.constant dense<0.000000e+00> : vector<16x64xf32>
    %43 = tpu.matmul %26, %2, %cst_39 {dimension_numbers = #tpu.dot_dimension_numbers<[1], [0], [0], [1], [0, 0, 1, 1], [], []>} : vector<16x32xf32>, vector<32x64xf32>, vector<16x64xf32> -> vector<16x64xf32>
    %44 = vector.broadcast %15 : vector<1x64xf32> to vector<16x64xf32>
    %45 = arith.addf %43, %44 : vector<16x64xf32>
    %cst_40 = arith.constant 0.000000e+00 : f32
    %46 = vector.broadcast %cst_40 : f32 to vector<16x64xf32>
    %47 = arith.maximumf %45, %46 : vector<16x64xf32>
    %cst_41 = arith.constant dense<0.000000e+00> : vector<16x64xf32>
    %48 = tpu.matmul %47, %8, %cst_41 {dimension_numbers = #tpu.dot_dimension_numbers<[1], [0], [0], [1], [0, 0, 1, 1], [], []>} : vector<16x64xf32>, vector<64x64xf32>, vector<16x64xf32> -> vector<16x64xf32>
    %49 = vector.broadcast %16 : vector<1x64xf32> to vector<16x64xf32>
    %50 = arith.addf %48, %49 : vector<16x64xf32>
    %c0_42 = arith.constant 0 : index
    %c0_43 = arith.constant 0 : index
    %c0_44 = arith.constant 0 : index
    %51 = vector.load %arg3[%c0_42, %c0_43, %c0_44] : memref<2x1x16xf32, #tpu.memory_space<vmem>>, vector<1x1x16xf32>
    %52 = vector.shape_cast %51 : vector<1x1x16xf32> to vector<1x16xf32>
    %53 = vector.extract_strided_slice %34 {offsets = [0, 0], sizes = [8, 32], strides = [1, 1]} : vector<16x64xf32> to vector<8x32xf32>
    %54 = vector.extract_strided_slice %34 {offsets = [0, 32], sizes = [8, 32], strides = [1, 1]} : vector<16x64xf32> to vector<8x32xf32>
    %55 = vector.extract_strided_slice %42 {offsets = [0, 0], sizes = [8, 32], strides = [1, 1]} : vector<16x64xf32> to vector<8x32xf32>
    %56 = vector.extract_strided_slice %50 {offsets = [0, 0], sizes = [8, 32], strides = [1, 1]} : vector<16x64xf32> to vector<8x32xf32>
    %57 = arith.mulf %53, %53 : vector<8x32xf32>
    %cst_45 = arith.constant dense<0.000000e+00> : vector<32xf32>
    %58 = vector.multi_reduction <add>, %57, %cst_45 [0] : vector<8x32xf32> to vector<32xf32>
    %59 = vector.shape_cast %58 : vector<32xf32> to vector<1x32xf32>
    %cst_46 = arith.constant 1.000000e-24 : f32
    %60 = vector.broadcast %cst_46 : f32 to vector<1x32xf32>
    %61 = arith.maximumf %59, %60 : vector<1x32xf32>
    %62 = math.rsqrt %61 : vector<1x32xf32>
    %63 = vector.broadcast %62 : vector<1x32xf32> to vector<8x32xf32>
    %64 = arith.mulf %53, %63 : vector<8x32xf32>
    %65 = arith.mulf %54, %54 : vector<8x32xf32>
    %cst_47 = arith.constant dense<0.000000e+00> : vector<32xf32>
    %66 = vector.multi_reduction <add>, %65, %cst_47 [0] : vector<8x32xf32> to vector<32xf32>
    %67 = vector.shape_cast %66 : vector<32xf32> to vector<1x32xf32>
    %cst_48 = arith.constant 1.000000e-24 : f32
    %68 = vector.broadcast %cst_48 : f32 to vector<1x32xf32>
    %69 = arith.maximumf %67, %68 : vector<1x32xf32>
    %70 = math.rsqrt %69 : vector<1x32xf32>
    %71 = vector.broadcast %70 : vector<1x32xf32> to vector<8x32xf32>
    %72 = arith.mulf %54, %71 : vector<8x32xf32>
    %73 = arith.mulf %55, %55 : vector<8x32xf32>
    %cst_49 = arith.constant dense<0.000000e+00> : vector<32xf32>
    %74 = vector.multi_reduction <add>, %73, %cst_49 [0] : vector<8x32xf32> to vector<32xf32>
    %75 = vector.shape_cast %74 : vector<32xf32> to vector<1x32xf32>
    %cst_50 = arith.constant 1.000000e-24 : f32
    %76 = vector.broadcast %cst_50 : f32 to vector<1x32xf32>
    %77 = arith.maximumf %75, %76 : vector<1x32xf32>
    %78 = math.rsqrt %77 : vector<1x32xf32>
    %79 = vector.broadcast %78 : vector<1x32xf32> to vector<8x32xf32>
    %80 = arith.mulf %55, %79 : vector<8x32xf32>
    %81 = arith.mulf %56, %56 : vector<8x32xf32>
    %cst_51 = arith.constant dense<0.000000e+00> : vector<32xf32>
    %82 = vector.multi_reduction <add>, %81, %cst_51 [0] : vector<8x32xf32> to vector<32xf32>
    %83 = vector.shape_cast %82 : vector<32xf32> to vector<1x32xf32>
    %cst_52 = arith.constant 1.000000e-24 : f32
    %84 = vector.broadcast %cst_52 : f32 to vector<1x32xf32>
    %85 = arith.maximumf %83, %84 : vector<1x32xf32>
    %86 = math.rsqrt %85 : vector<1x32xf32>
    %87 = vector.broadcast %86 : vector<1x32xf32> to vector<8x32xf32>
    %88 = arith.mulf %56, %87 : vector<8x32xf32>
    %89 = vector.extract_strided_slice %52 {offsets = [0, 0], sizes = [1, 8], strides = [1, 1]} : vector<1x16xf32> to vector<1x8xf32>
    %cst_53 = arith.constant dense<0.000000e+00> : vector<8x8xf32>
    %90 = tpu.matmul %64, %80, %cst_53 {dimension_numbers = #tpu.dot_dimension_numbers<[1], [1], [0], [0], [0, 0, 1, 0], [], []>} : vector<8x32xf32>, vector<8x32xf32>, vector<8x8xf32> -> vector<8x8xf32>
    %91 = vector.broadcast %89 : vector<1x8xf32> to vector<8x8xf32>
    %92 = arith.minimumf %90, %91 : vector<8x8xf32>
    %cst_54 = arith.constant dense<0xFF800000> : vector<8xf32>
    %93 = vector.multi_reduction <maximumf>, %92, %cst_54 [0] : vector<8x8xf32> to vector<8xf32>
    %94 = vector.shape_cast %93 : vector<8xf32> to vector<1x8xf32>
    %95 = vector.broadcast %94 : vector<1x8xf32> to vector<8x8xf32>
    %96 = arith.subf %92, %95 : vector<8x8xf32>
    %97 = math.exp %96 : vector<8x8xf32>
    %cst_55 = arith.constant dense<0.000000e+00> : vector<8xf32>
    %98 = vector.multi_reduction <add>, %97, %cst_55 [0] : vector<8x8xf32> to vector<8xf32>
    %99 = vector.shape_cast %98 : vector<8xf32> to vector<1x8xf32>
    %100 = tpu.reciprocal %99 {approx = true} : vector<1x8xf32> -> vector<1x8xf32>
    %101 = vector.broadcast %100 : vector<1x8xf32> to vector<8x8xf32>
    %102 = arith.mulf %97, %101 : vector<8x8xf32>
    %cst_56 = arith.constant dense<0.000000e+00> : vector<8x32xf32>
    %103 = tpu.matmul %102, %80, %cst_56 {dimension_numbers = #tpu.dot_dimension_numbers<[1], [0], [0], [1], [0, 0, 1, 1], [], []>} : vector<8x8xf32>, vector<8x32xf32>, vector<8x32xf32> -> vector<8x32xf32>
    %104 = vector.extract_strided_slice %52 {offsets = [0, 8], sizes = [1, 8], strides = [1, 1]} : vector<1x16xf32> to vector<1x8xf32>
    %cst_57 = arith.constant dense<0.000000e+00> : vector<8x8xf32>
    %105 = tpu.matmul %72, %88, %cst_57 {dimension_numbers = #tpu.dot_dimension_numbers<[1], [1], [0], [0], [0, 0, 1, 0], [], []>} : vector<8x32xf32>, vector<8x32xf32>, vector<8x8xf32> -> vector<8x8xf32>
    %106 = vector.broadcast %104 : vector<1x8xf32> to vector<8x8xf32>
    %107 = arith.minimumf %105, %106 : vector<8x8xf32>
    %cst_58 = arith.constant dense<0xFF800000> : vector<8xf32>
    %108 = vector.multi_reduction <maximumf>, %107, %cst_58 [0] : vector<8x8xf32> to vector<8xf32>
    %109 = vector.shape_cast %108 : vector<8xf32> to vector<1x8xf32>
    %110 = vector.broadcast %109 : vector<1x8xf32> to vector<8x8xf32>
    %111 = arith.subf %107, %110 : vector<8x8xf32>
    %112 = math.exp %111 : vector<8x8xf32>
    %cst_59 = arith.constant dense<0.000000e+00> : vector<8xf32>
    %113 = vector.multi_reduction <add>, %112, %cst_59 [0] : vector<8x8xf32> to vector<8xf32>
    %114 = vector.shape_cast %113 : vector<8xf32> to vector<1x8xf32>
    %115 = tpu.reciprocal %114 {approx = true} : vector<1x8xf32> -> vector<1x8xf32>
    %116 = vector.broadcast %115 : vector<1x8xf32> to vector<8x8xf32>
    %117 = arith.mulf %112, %116 : vector<8x8xf32>
    %cst_60 = arith.constant dense<0.000000e+00> : vector<8x32xf32>
    %118 = tpu.matmul %117, %88, %cst_60 {dimension_numbers = #tpu.dot_dimension_numbers<[1], [0], [0], [1], [0, 0, 1, 1], [], []>} : vector<8x8xf32>, vector<8x32xf32>, vector<8x32xf32> -> vector<8x32xf32>
    %c1_61 = arith.constant 1 : index
    %c0_62 = arith.constant 0 : index
    %c0_63 = arith.constant 0 : index
    %119 = vector.load %arg3[%c1_61, %c0_62, %c0_63] : memref<2x1x16xf32, #tpu.memory_space<vmem>>, vector<1x1x16xf32>
    %120 = vector.shape_cast %119 : vector<1x1x16xf32> to vector<1x16xf32>
    %121 = vector.extract_strided_slice %34 {offsets = [8, 0], sizes = [8, 32], strides = [1, 1]} : vector<16x64xf32> to vector<8x32xf32>
    %122 = vector.extract_strided_slice %34 {offsets = [8, 32], sizes = [8, 32], strides = [1, 1]} : vector<16x64xf32> to vector<8x32xf32>
    %123 = vector.extract_strided_slice %42 {offsets = [8, 0], sizes = [8, 32], strides = [1, 1]} : vector<16x64xf32> to vector<8x32xf32>
    %124 = vector.extract_strided_slice %50 {offsets = [8, 0], sizes = [8, 32], strides = [1, 1]} : vector<16x64xf32> to vector<8x32xf32>
    %125 = arith.mulf %121, %121 : vector<8x32xf32>
    %cst_64 = arith.constant dense<0.000000e+00> : vector<32xf32>
    %126 = vector.multi_reduction <add>, %125, %cst_64 [0] : vector<8x32xf32> to vector<32xf32>
    %127 = vector.shape_cast %126 : vector<32xf32> to vector<1x32xf32>
    %cst_65 = arith.constant 1.000000e-24 : f32
    %128 = vector.broadcast %cst_65 : f32 to vector<1x32xf32>
    %129 = arith.maximumf %127, %128 : vector<1x32xf32>
    %130 = math.rsqrt %129 : vector<1x32xf32>
    %131 = vector.broadcast %130 : vector<1x32xf32> to vector<8x32xf32>
    %132 = arith.mulf %121, %131 : vector<8x32xf32>
    %133 = arith.mulf %122, %122 : vector<8x32xf32>
    %cst_66 = arith.constant dense<0.000000e+00> : vector<32xf32>
    %134 = vector.multi_reduction <add>, %133, %cst_66 [0] : vector<8x32xf32> to vector<32xf32>
    %135 = vector.shape_cast %134 : vector<32xf32> to vector<1x32xf32>
    %cst_67 = arith.constant 1.000000e-24 : f32
    %136 = vector.broadcast %cst_67 : f32 to vector<1x32xf32>
    %137 = arith.maximumf %135, %136 : vector<1x32xf32>
    %138 = math.rsqrt %137 : vector<1x32xf32>
    %139 = vector.broadcast %138 : vector<1x32xf32> to vector<8x32xf32>
    %140 = arith.mulf %122, %139 : vector<8x32xf32>
    %141 = arith.mulf %123, %123 : vector<8x32xf32>
    %cst_68 = arith.constant dense<0.000000e+00> : vector<32xf32>
    %142 = vector.multi_reduction <add>, %141, %cst_68 [0] : vector<8x32xf32> to vector<32xf32>
    %143 = vector.shape_cast %142 : vector<32xf32> to vector<1x32xf32>
    %cst_69 = arith.constant 1.000000e-24 : f32
    %144 = vector.broadcast %cst_69 : f32 to vector<1x32xf32>
    %145 = arith.maximumf %143, %144 : vector<1x32xf32>
    %146 = math.rsqrt %145 : vector<1x32xf32>
    %147 = vector.broadcast %146 : vector<1x32xf32> to vector<8x32xf32>
    %148 = arith.mulf %123, %147 : vector<8x32xf32>
    %149 = arith.mulf %124, %124 : vector<8x32xf32>
    %cst_70 = arith.constant dense<0.000000e+00> : vector<32xf32>
    %150 = vector.multi_reduction <add>, %149, %cst_70 [0] : vector<8x32xf32> to vector<32xf32>
    %151 = vector.shape_cast %150 : vector<32xf32> to vector<1x32xf32>
    %cst_71 = arith.constant 1.000000e-24 : f32
    %152 = vector.broadcast %cst_71 : f32 to vector<1x32xf32>
    %153 = arith.maximumf %151, %152 : vector<1x32xf32>
    %154 = math.rsqrt %153 : vector<1x32xf32>
    %155 = vector.broadcast %154 : vector<1x32xf32> to vector<8x32xf32>
    %156 = arith.mulf %124, %155 : vector<8x32xf32>
    %157 = vector.extract_strided_slice %120 {offsets = [0, 0], sizes = [1, 8], strides = [1, 1]} : vector<1x16xf32> to vector<1x8xf32>
    %cst_72 = arith.constant dense<0.000000e+00> : vector<8x8xf32>
    %158 = tpu.matmul %132, %148, %cst_72 {dimension_numbers = #tpu.dot_dimension_numbers<[1], [1], [0], [0], [0, 0, 1, 0], [], []>} : vector<8x32xf32>, vector<8x32xf32>, vector<8x8xf32> -> vector<8x8xf32>
    %159 = vector.broadcast %157 : vector<1x8xf32> to vector<8x8xf32>
    %160 = arith.minimumf %158, %159 : vector<8x8xf32>
    %cst_73 = arith.constant dense<0xFF800000> : vector<8xf32>
    %161 = vector.multi_reduction <maximumf>, %160, %cst_73 [0] : vector<8x8xf32> to vector<8xf32>
    %162 = vector.shape_cast %161 : vector<8xf32> to vector<1x8xf32>
    %163 = vector.broadcast %162 : vector<1x8xf32> to vector<8x8xf32>
    %164 = arith.subf %160, %163 : vector<8x8xf32>
    %165 = math.exp %164 : vector<8x8xf32>
    %cst_74 = arith.constant dense<0.000000e+00> : vector<8xf32>
    %166 = vector.multi_reduction <add>, %165, %cst_74 [0] : vector<8x8xf32> to vector<8xf32>
    %167 = vector.shape_cast %166 : vector<8xf32> to vector<1x8xf32>
    %168 = tpu.reciprocal %167 {approx = true} : vector<1x8xf32> -> vector<1x8xf32>
    %169 = vector.broadcast %168 : vector<1x8xf32> to vector<8x8xf32>
    %170 = arith.mulf %165, %169 : vector<8x8xf32>
    %cst_75 = arith.constant dense<0.000000e+00> : vector<8x32xf32>
    %171 = tpu.matmul %170, %148, %cst_75 {dimension_numbers = #tpu.dot_dimension_numbers<[1], [0], [0], [1], [0, 0, 1, 1], [], []>} : vector<8x8xf32>, vector<8x32xf32>, vector<8x32xf32> -> vector<8x32xf32>
    %172 = vector.extract_strided_slice %120 {offsets = [0, 8], sizes = [1, 8], strides = [1, 1]} : vector<1x16xf32> to vector<1x8xf32>
    %cst_76 = arith.constant dense<0.000000e+00> : vector<8x8xf32>
    %173 = tpu.matmul %140, %156, %cst_76 {dimension_numbers = #tpu.dot_dimension_numbers<[1], [1], [0], [0], [0, 0, 1, 0], [], []>} : vector<8x32xf32>, vector<8x32xf32>, vector<8x8xf32> -> vector<8x8xf32>
    %174 = vector.broadcast %172 : vector<1x8xf32> to vector<8x8xf32>
    %175 = arith.minimumf %173, %174 : vector<8x8xf32>
    %cst_77 = arith.constant dense<0xFF800000> : vector<8xf32>
    %176 = vector.multi_reduction <maximumf>, %175, %cst_77 [0] : vector<8x8xf32> to vector<8xf32>
    %177 = vector.shape_cast %176 : vector<8xf32> to vector<1x8xf32>
    %178 = vector.broadcast %177 : vector<1x8xf32> to vector<8x8xf32>
    %179 = arith.subf %175, %178 : vector<8x8xf32>
    %180 = math.exp %179 : vector<8x8xf32>
    %cst_78 = arith.constant dense<0.000000e+00> : vector<8xf32>
    %181 = vector.multi_reduction <add>, %180, %cst_78 [0] : vector<8x8xf32> to vector<8xf32>
    %182 = vector.shape_cast %181 : vector<8xf32> to vector<1x8xf32>
    %183 = tpu.reciprocal %182 {approx = true} : vector<1x8xf32> -> vector<1x8xf32>
    %184 = vector.broadcast %183 : vector<1x8xf32> to vector<8x8xf32>
    %185 = arith.mulf %180, %184 : vector<8x8xf32>
    %cst_79 = arith.constant dense<0.000000e+00> : vector<8x32xf32>
    %186 = tpu.matmul %185, %156, %cst_79 {dimension_numbers = #tpu.dot_dimension_numbers<[1], [0], [0], [1], [0, 0, 1, 1], [], []>} : vector<8x8xf32>, vector<8x32xf32>, vector<8x32xf32> -> vector<8x32xf32>
    %187 = tpu.concatenate %103, %171 in 0 : vector<8x32xf32>, vector<8x32xf32> -> vector<16x32xf32>
    %188 = tpu.concatenate %118, %186 in 0 : vector<8x32xf32>, vector<8x32xf32> -> vector<16x32xf32>
    %cst_80 = arith.constant dense<0.000000e+00> : vector<16x64xf32>
    %189 = tpu.matmul %22, %3, %cst_80 {dimension_numbers = #tpu.dot_dimension_numbers<[1], [0], [0], [1], [0, 0, 1, 1], [], []>} : vector<16x32xf32>, vector<32x64xf32>, vector<16x64xf32> -> vector<16x64xf32>
    %190 = vector.broadcast %17 : vector<1x64xf32> to vector<16x64xf32>
    %191 = arith.addf %189, %190 : vector<16x64xf32>
    %cst_81 = arith.constant dense<0.000000e+00> : vector<16x64xf32>
    %192 = tpu.matmul %188, %4, %cst_81 {dimension_numbers = #tpu.dot_dimension_numbers<[1], [0], [0], [1], [0, 0, 1, 1], [], []>} : vector<16x32xf32>, vector<32x64xf32>, vector<16x64xf32> -> vector<16x64xf32>
    %193 = arith.addf %191, %192 : vector<16x64xf32>
    %cst_82 = arith.constant 0.000000e+00 : f32
    %194 = vector.broadcast %cst_82 : f32 to vector<16x64xf32>
    %195 = arith.maximumf %193, %194 : vector<16x64xf32>
    %cst_83 = arith.constant dense<0.000000e+00> : vector<16x64xf32>
    %196 = tpu.matmul %195, %9, %cst_83 {dimension_numbers = #tpu.dot_dimension_numbers<[1], [0], [0], [1], [0, 0, 1, 1], [], []>} : vector<16x64xf32>, vector<64x64xf32>, vector<16x64xf32> -> vector<16x64xf32>
    %197 = vector.broadcast %18 : vector<1x64xf32> to vector<16x64xf32>
    %198 = arith.addf %196, %197 : vector<16x64xf32>
    %199 = vector.extract_strided_slice %198 {offsets = [0, 0], sizes = [16, 1], strides = [1, 1]} : vector<16x64xf32> to vector<16x1xf32>
    %200 = vector.extract_strided_slice %198 {offsets = [0, 1], sizes = [16, 1], strides = [1, 1]} : vector<16x64xf32> to vector<16x1xf32>
    %201 = arith.maximumf %199, %200 : vector<16x1xf32>
    %202 = arith.subf %199, %201 : vector<16x1xf32>
    %203 = math.exp %202 : vector<16x1xf32>
    %204 = arith.subf %200, %201 : vector<16x1xf32>
    %205 = math.exp %204 : vector<16x1xf32>
    %206 = arith.addf %203, %205 : vector<16x1xf32>
    %207 = tpu.reciprocal %206 {approx = true} : vector<16x1xf32> -> vector<16x1xf32>
    %208 = arith.mulf %203, %207 : vector<16x1xf32>
    %209 = vector.broadcast %208 : vector<16x1xf32> to vector<16x32xf32>
    %210 = arith.mulf %209, %187 : vector<16x32xf32>
    %211 = arith.mulf %205, %207 : vector<16x1xf32>
    %212 = vector.broadcast %211 : vector<16x1xf32> to vector<16x32xf32>
    %213 = arith.mulf %212, %188 : vector<16x32xf32>
    %214 = arith.addf %210, %213 : vector<16x32xf32>
    %cst_84 = arith.constant dense<0.000000e+00> : vector<16x64xf32>
    %215 = tpu.matmul %214, %5, %cst_84 {dimension_numbers = #tpu.dot_dimension_numbers<[1], [0], [0], [1], [0, 0, 1, 1], [], []>} : vector<16x32xf32>, vector<32x64xf32>, vector<16x64xf32> -> vector<16x64xf32>
    %216 = vector.broadcast %19 : vector<1x64xf32> to vector<16x64xf32>
    %217 = arith.addf %215, %216 : vector<16x64xf32>
    %cst_85 = arith.constant 0.000000e+00 : f32
    %218 = vector.broadcast %cst_85 : f32 to vector<16x64xf32>
    %219 = arith.maximumf %217, %218 : vector<16x64xf32>
    %cst_86 = arith.constant dense<0.000000e+00> : vector<16x64xf32>
    %220 = tpu.matmul %219, %10, %cst_86 {dimension_numbers = #tpu.dot_dimension_numbers<[1], [0], [0], [1], [0, 0, 1, 1], [], []>} : vector<16x64xf32>, vector<64x64xf32>, vector<16x64xf32> -> vector<16x64xf32>
    %221 = vector.broadcast %20 : vector<1x64xf32> to vector<16x64xf32>
    %222 = arith.addf %220, %221 : vector<16x64xf32>
    %223 = vector.extract_strided_slice %222 {offsets = [0, 0], sizes = [16, 32], strides = [1, 1]} : vector<16x64xf32> to vector<16x32xf32>
    %224 = vector.extract_strided_slice %223 {offsets = [0, 0], sizes = [8, 32], strides = [1, 1]} : vector<16x32xf32> to vector<8x32xf32>
    %225 = vector.extract_strided_slice %42 {offsets = [0, 32], sizes = [8, 32], strides = [1, 1]} : vector<16x64xf32> to vector<8x32xf32>
    %226 = vector.extract_strided_slice %50 {offsets = [0, 32], sizes = [8, 32], strides = [1, 1]} : vector<16x64xf32> to vector<8x32xf32>
    %227 = tpu.concatenate %225, %226 in 0 : vector<8x32xf32>, vector<8x32xf32> -> vector<16x32xf32>
    %c0_87 = arith.constant 0 : index
    %c0_88 = arith.constant 0 : index
    %c0_89 = arith.constant 0 : index
    %228 = vector.load %arg1[%c0_87, %c0_88, %c0_89] : memref<2x8x32xf32, #tpu.memory_space<vmem>>, vector<1x8x32xf32>
    %229 = vector.shape_cast %228 : vector<1x8x32xf32> to vector<8x32xf32>
    %c0_90 = arith.constant 0 : index
    %c0_91 = arith.constant 0 : index
    %c0_92 = arith.constant 0 : index
    %230 = vector.load %arg2[%c0_90, %c0_91, %c0_92] : memref<2x8x32xf32, #tpu.memory_space<vmem>>, vector<1x8x32xf32>
    %231 = vector.shape_cast %230 : vector<1x8x32xf32> to vector<8x32xf32>
    %232 = tpu.concatenate %229, %231 in 0 : vector<8x32xf32>, vector<8x32xf32> -> vector<16x32xf32>
    %233 = arith.mulf %224, %224 : vector<8x32xf32>
    %cst_93 = arith.constant dense<0.000000e+00> : vector<32xf32>
    %234 = vector.multi_reduction <add>, %233, %cst_93 [0] : vector<8x32xf32> to vector<32xf32>
    %235 = vector.shape_cast %234 : vector<32xf32> to vector<1x32xf32>
    %cst_94 = arith.constant 1.000000e-24 : f32
    %236 = vector.broadcast %cst_94 : f32 to vector<1x32xf32>
    %237 = arith.maximumf %235, %236 : vector<1x32xf32>
    %238 = math.rsqrt %237 : vector<1x32xf32>
    %239 = vector.broadcast %238 : vector<1x32xf32> to vector<8x32xf32>
    %240 = arith.mulf %224, %239 : vector<8x32xf32>
    %241 = arith.mulf %227, %227 : vector<16x32xf32>
    %cst_95 = arith.constant dense<0.000000e+00> : vector<32xf32>
    %242 = vector.multi_reduction <add>, %241, %cst_95 [0] : vector<16x32xf32> to vector<32xf32>
    %243 = vector.shape_cast %242 : vector<32xf32> to vector<1x32xf32>
    %cst_96 = arith.constant 1.000000e-24 : f32
    %244 = vector.broadcast %cst_96 : f32 to vector<1x32xf32>
    %245 = arith.maximumf %243, %244 : vector<1x32xf32>
    %246 = math.rsqrt %245 : vector<1x32xf32>
    %247 = vector.broadcast %246 : vector<1x32xf32> to vector<16x32xf32>
    %248 = arith.mulf %227, %247 : vector<16x32xf32>
    %cst_97 = arith.constant dense<0.000000e+00> : vector<8x16xf32>
    %249 = tpu.matmul %240, %248, %cst_97 {dimension_numbers = #tpu.dot_dimension_numbers<[1], [1], [0], [0], [0, 0, 1, 0], [], []>} : vector<8x32xf32>, vector<16x32xf32>, vector<8x16xf32> -> vector<8x16xf32>
    %cst_98 = arith.constant dense<0xFF800000> : vector<8xf32>
    %250 = vector.multi_reduction <maximumf>, %249, %cst_98 [1] : vector<8x16xf32> to vector<8xf32>
    %251 = vector.shape_cast %250 : vector<8xf32> to vector<8x1xf32>
    %252 = vector.broadcast %251 : vector<8x1xf32> to vector<8x16xf32>
    %253 = arith.subf %249, %252 : vector<8x16xf32>
    %254 = math.exp %253 : vector<8x16xf32>
    %cst_99 = arith.constant dense<0.000000e+00> : vector<8xf32>
    %255 = vector.multi_reduction <add>, %254, %cst_99 [1] : vector<8x16xf32> to vector<8xf32>
    %256 = vector.shape_cast %255 : vector<8xf32> to vector<8x1xf32>
    %257 = tpu.reciprocal %256 {approx = true} : vector<8x1xf32> -> vector<8x1xf32>
    %258 = vector.broadcast %257 : vector<8x1xf32> to vector<8x16xf32>
    %259 = arith.mulf %254, %258 : vector<8x16xf32>
    %c0_100 = arith.constant 0 : index
    %c0_101 = arith.constant 0 : index
    %c0_102 = arith.constant 0 : index
    %260 = vector.load %arg9[%c0_100, %c0_101, %c0_102] : memref<2x8x16xf32, #tpu.memory_space<vmem>>, vector<1x8x16xf32>
    %261 = vector.shape_cast %260 : vector<1x8x16xf32> to vector<8x16xf32>
    %262 = vector.shape_cast %259 : vector<8x16xf32> to vector<1x8x16xf32>
    tpu.vector_store %arg9[%c0_100, %c0_101, %c0_102], %262 {strides = array<i32>} : memref<2x8x16xf32, #tpu.memory_space<vmem>>, vector<1x8x16xf32>,
    %263 = vector.extract_strided_slice %259 {offsets = [0, 0], sizes = [8, 8], strides = [1, 1]} : vector<8x16xf32> to vector<8x8xf32>
    %c0_103 = arith.constant 0 : index
    %c0_104 = arith.constant 0 : index
    %c0_105 = arith.constant 0 : index
    %264 = vector.load %arg7[%c0_103, %c0_104, %c0_105] : memref<2x8x8xf32, #tpu.memory_space<vmem>>, vector<1x8x8xf32>
    %265 = vector.shape_cast %264 : vector<1x8x8xf32> to vector<8x8xf32>
    %266 = vector.shape_cast %263 : vector<8x8xf32> to vector<1x8x8xf32>
    tpu.vector_store %arg7[%c0_103, %c0_104, %c0_105], %266 {strides = array<i32>} : memref<2x8x8xf32, #tpu.memory_space<vmem>>, vector<1x8x8xf32>,
    %267 = vector.extract_strided_slice %259 {offsets = [0, 8], sizes = [8, 8], strides = [1, 1]} : vector<8x16xf32> to vector<8x8xf32>
    %c0_106 = arith.constant 0 : index
    %c0_107 = arith.constant 0 : index
    %c0_108 = arith.constant 0 : index
    %268 = vector.load %arg8[%c0_106, %c0_107, %c0_108] : memref<2x8x8xf32, #tpu.memory_space<vmem>>, vector<1x8x8xf32>
    %269 = vector.shape_cast %268 : vector<1x8x8xf32> to vector<8x8xf32>
    %270 = vector.shape_cast %267 : vector<8x8xf32> to vector<1x8x8xf32>
    tpu.vector_store %arg8[%c0_106, %c0_107, %c0_108], %270 {strides = array<i32>} : memref<2x8x8xf32, #tpu.memory_space<vmem>>, vector<1x8x8xf32>,
    %cst_109 = arith.constant dense<0.000000e+00> : vector<8x32xf32>
    %271 = tpu.matmul %259, %232, %cst_109 {dimension_numbers = #tpu.dot_dimension_numbers<[1], [0], [0], [1], [0, 0, 1, 1], [], []>} : vector<8x16xf32>, vector<16x32xf32>, vector<8x32xf32> -> vector<8x32xf32>
    %c0_110 = arith.constant 0 : index
    %c0_111 = arith.constant 0 : index
    %c0_112 = arith.constant 0 : index
    %272 = vector.load %arg10[%c0_110, %c0_111, %c0_112] : memref<2x8x32xf32, #tpu.memory_space<vmem>>, vector<1x8x32xf32>
    %273 = vector.shape_cast %272 : vector<1x8x32xf32> to vector<8x32xf32>
    %274 = vector.shape_cast %271 : vector<8x32xf32> to vector<1x8x32xf32>
    tpu.vector_store %arg10[%c0_110, %c0_111, %c0_112], %274 {strides = array<i32>} : memref<2x8x32xf32, #tpu.memory_space<vmem>>, vector<1x8x32xf32>,
    %275 = vector.extract_strided_slice %223 {offsets = [8, 0], sizes = [8, 32], strides = [1, 1]} : vector<16x32xf32> to vector<8x32xf32>
    %276 = vector.extract_strided_slice %42 {offsets = [8, 32], sizes = [8, 32], strides = [1, 1]} : vector<16x64xf32> to vector<8x32xf32>
    %277 = vector.extract_strided_slice %50 {offsets = [8, 32], sizes = [8, 32], strides = [1, 1]} : vector<16x64xf32> to vector<8x32xf32>
    %278 = tpu.concatenate %276, %277 in 0 : vector<8x32xf32>, vector<8x32xf32> -> vector<16x32xf32>
    %c1_113 = arith.constant 1 : index
    %c0_114 = arith.constant 0 : index
    %c0_115 = arith.constant 0 : index
    %279 = vector.load %arg1[%c1_113, %c0_114, %c0_115] : memref<2x8x32xf32, #tpu.memory_space<vmem>>, vector<1x8x32xf32>
    %280 = vector.shape_cast %279 : vector<1x8x32xf32> to vector<8x32xf32>
    %c1_116 = arith.constant 1 : index
    %c0_117 = arith.constant 0 : index
    %c0_118 = arith.constant 0 : index
    %281 = vector.load %arg2[%c1_116, %c0_117, %c0_118] : memref<2x8x32xf32, #tpu.memory_space<vmem>>, vector<1x8x32xf32>
    %282 = vector.shape_cast %281 : vector<1x8x32xf32> to vector<8x32xf32>
    %283 = tpu.concatenate %280, %282 in 0 : vector<8x32xf32>, vector<8x32xf32> -> vector<16x32xf32>
    %284 = arith.mulf %275, %275 : vector<8x32xf32>
    %cst_119 = arith.constant dense<0.000000e+00> : vector<32xf32>
    %285 = vector.multi_reduction <add>, %284, %cst_119 [0] : vector<8x32xf32> to vector<32xf32>
    %286 = vector.shape_cast %285 : vector<32xf32> to vector<1x32xf32>
    %cst_120 = arith.constant 1.000000e-24 : f32
    %287 = vector.broadcast %cst_120 : f32 to vector<1x32xf32>
    %288 = arith.maximumf %286, %287 : vector<1x32xf32>
    %289 = math.rsqrt %288 : vector<1x32xf32>
    %290 = vector.broadcast %289 : vector<1x32xf32> to vector<8x32xf32>
    %291 = arith.mulf %275, %290 : vector<8x32xf32>
    %292 = arith.mulf %278, %278 : vector<16x32xf32>
    %cst_121 = arith.constant dense<0.000000e+00> : vector<32xf32>
    %293 = vector.multi_reduction <add>, %292, %cst_121 [0] : vector<16x32xf32> to vector<32xf32>
    %294 = vector.shape_cast %293 : vector<32xf32> to vector<1x32xf32>
    %cst_122 = arith.constant 1.000000e-24 : f32
    %295 = vector.broadcast %cst_122 : f32 to vector<1x32xf32>
    %296 = arith.maximumf %294, %295 : vector<1x32xf32>
    %297 = math.rsqrt %296 : vector<1x32xf32>
    %298 = vector.broadcast %297 : vector<1x32xf32> to vector<16x32xf32>
    %299 = arith.mulf %278, %298 : vector<16x32xf32>
    %cst_123 = arith.constant dense<0.000000e+00> : vector<8x16xf32>
    %300 = tpu.matmul %291, %299, %cst_123 {dimension_numbers = #tpu.dot_dimension_numbers<[1], [1], [0], [0], [0, 0, 1, 0], [], []>} : vector<8x32xf32>, vector<16x32xf32>, vector<8x16xf32> -> vector<8x16xf32>
    %cst_124 = arith.constant dense<0xFF800000> : vector<8xf32>
    %301 = vector.multi_reduction <maximumf>, %300, %cst_124 [1] : vector<8x16xf32> to vector<8xf32>
    %302 = vector.shape_cast %301 : vector<8xf32> to vector<8x1xf32>
    %303 = vector.broadcast %302 : vector<8x1xf32> to vector<8x16xf32>
    %304 = arith.subf %300, %303 : vector<8x16xf32>
    %305 = math.exp %304 : vector<8x16xf32>
    %cst_125 = arith.constant dense<0.000000e+00> : vector<8xf32>
    %306 = vector.multi_reduction <add>, %305, %cst_125 [1] : vector<8x16xf32> to vector<8xf32>
    %307 = vector.shape_cast %306 : vector<8xf32> to vector<8x1xf32>
    %308 = tpu.reciprocal %307 {approx = true} : vector<8x1xf32> -> vector<8x1xf32>
    %309 = vector.broadcast %308 : vector<8x1xf32> to vector<8x16xf32>
    %310 = arith.mulf %305, %309 : vector<8x16xf32>
    %c1_126 = arith.constant 1 : index
    %c0_127 = arith.constant 0 : index
    %c0_128 = arith.constant 0 : index
    %311 = vector.load %arg9[%c1_126, %c0_127, %c0_128] : memref<2x8x16xf32, #tpu.memory_space<vmem>>, vector<1x8x16xf32>
    %312 = vector.shape_cast %311 : vector<1x8x16xf32> to vector<8x16xf32>
    %313 = vector.shape_cast %310 : vector<8x16xf32> to vector<1x8x16xf32>
    tpu.vector_store %arg9[%c1_126, %c0_127, %c0_128], %313 {strides = array<i32>} : memref<2x8x16xf32, #tpu.memory_space<vmem>>, vector<1x8x16xf32>,
    %314 = vector.extract_strided_slice %310 {offsets = [0, 0], sizes = [8, 8], strides = [1, 1]} : vector<8x16xf32> to vector<8x8xf32>
    %c1_129 = arith.constant 1 : index
    %c0_130 = arith.constant 0 : index
    %c0_131 = arith.constant 0 : index
    %315 = vector.load %arg7[%c1_129, %c0_130, %c0_131] : memref<2x8x8xf32, #tpu.memory_space<vmem>>, vector<1x8x8xf32>
    %316 = vector.shape_cast %315 : vector<1x8x8xf32> to vector<8x8xf32>
    %317 = vector.shape_cast %314 : vector<8x8xf32> to vector<1x8x8xf32>
    tpu.vector_store %arg7[%c1_129, %c0_130, %c0_131], %317 {strides = array<i32>} : memref<2x8x8xf32, #tpu.memory_space<vmem>>, vector<1x8x8xf32>,
    %318 = vector.extract_strided_slice %310 {offsets = [0, 8], sizes = [8, 8], strides = [1, 1]} : vector<8x16xf32> to vector<8x8xf32>
    %c1_132 = arith.constant 1 : index
    %c0_133 = arith.constant 0 : index
    %c0_134 = arith.constant 0 : index
    %319 = vector.load %arg8[%c1_132, %c0_133, %c0_134] : memref<2x8x8xf32, #tpu.memory_space<vmem>>, vector<1x8x8xf32>
    %320 = vector.shape_cast %319 : vector<1x8x8xf32> to vector<8x8xf32>
    %321 = vector.shape_cast %318 : vector<8x8xf32> to vector<1x8x8xf32>
    tpu.vector_store %arg8[%c1_132, %c0_133, %c0_134], %321 {strides = array<i32>} : memref<2x8x8xf32, #tpu.memory_space<vmem>>, vector<1x8x8xf32>,
    %cst_135 = arith.constant dense<0.000000e+00> : vector<8x32xf32>
    %322 = tpu.matmul %310, %283, %cst_135 {dimension_numbers = #tpu.dot_dimension_numbers<[1], [0], [0], [1], [0, 0, 1, 1], [], []>} : vector<8x16xf32>, vector<16x32xf32>, vector<8x32xf32> -> vector<8x32xf32>
    %c1_136 = arith.constant 1 : index
    %c0_137 = arith.constant 0 : index
    %c0_138 = arith.constant 0 : index
    %323 = vector.load %arg10[%c1_136, %c0_137, %c0_138] : memref<2x8x32xf32, #tpu.memory_space<vmem>>, vector<1x8x32xf32>
    %324 = vector.shape_cast %323 : vector<1x8x32xf32> to vector<8x32xf32>
    %325 = vector.shape_cast %322 : vector<8x32xf32> to vector<1x8x32xf32>
    tpu.vector_store %arg10[%c1_136, %c0_137, %c0_138], %325 {strides = array<i32>} : memref<2x8x32xf32, #tpu.memory_space<vmem>>, vector<1x8x32xf32>,
    return
  }
}

</mosaic_0001>

<llo_original>
// kernel: find_forward.1
$region0: #{find_forward.1}
  #allocation0 [shape = 'u32[]', space=smem, size = 0x4, offset = 0x4, fixed_abs, tag = 'smem constant byte address 0x4 - core index']
  #allocation1 [shape = 'u32[72,128]{1,0:T(1,128)}', space=vmem, size = 0x9000, scoped, tag = 'internal scratch']
  %s0 = inlined_call_operand.vmem [shape: f32[2,8,32], index: 0, kind: input, shape index: {}]
  %s1 = inlined_call_operand.vmem [shape: f32[2,8,32], index: 1, kind: input, shape index: {}]
  %s2 = inlined_call_operand.vmem [shape: f32[2,8,32], index: 2, kind: input, shape index: {}]
  %s3 = inlined_call_operand.vmem [shape: f32[2,1,16], index: 3, kind: input, shape index: {}]
  %s4 = inlined_call_operand.vmem [shape: f32[192,64], index: 4, kind: input, shape index: {}]
  %s5 = inlined_call_operand.vmem [shape: f32[320,64], index: 5, kind: input, shape index: {}]
  %s6 = inlined_call_operand.vmem [shape: f32[10,64], index: 6, kind: input, shape index: {}]
  %s7 = inlined_call_operand.hbm [shape: f32[2,8,8], index: 7, kind: output, shape index: {0}]
  %s8 = inlined_call_operand.hbm [shape: f32[2,8,8], index: 8, kind: output, shape index: {1}]
  %s9 = inlined_call_operand.hbm [shape: f32[2,8,16], index: 9, kind: output, shape index: {2}]
  %s10 = inlined_call_operand.hbm [shape: f32[2,8,32], index: 10, kind: output, shape index: {3}]
  %11 = xla_tuple %s7, %s8, %s9, %s10
  %s12 = sld [smem:[#allocation0]]
  $region62: #{find_forward.1} parent=0
    _
  %s14 = ssub.s32 1, %s12
  %s15 = scalar_select 0, %s14, %s12
  $region1: #{find_forward.1} parent=0
    #allocation2 [shape = 'u8[8192]{0}', space=vmem, size = 0x2000, scoped, tag = 'output window, operand 0, single buffered']
    #allocation3 [shape = 's32[1]{0}', space=sflag, size = 0x4, scoped, tag = 'scoped memory for find_forward.1']
    #allocation4 [shape = 'u8[8192]{0}', space=vmem, size = 0x2000, scoped, tag = 'output window, operand 1, single buffered']
    #allocation5 [shape = 's32[1]{0}', space=sflag, size = 0x4, scoped, tag = 'scoped memory for find_forward.1']
    #allocation6 [shape = 'u8[8192]{0}', space=vmem, size = 0x2000, scoped, tag = 'output window, operand 2, single buffered']
    #allocation7 [shape = 'u8[8192]{0}', space=vmem, size = 0x2000, scoped, tag = 'output window, operand 3, single buffered']
    #allocation8 [shape = 's32[1]{0}', space=sflag, size = 0x4, scoped, tag = 'scoped memory for find_forward.1']
    %16 = vsyncpa [#allocation3], 0
    %17 = vsyncpa [#allocation5], 0
    %18 = vsyncpa [#allocation8], 0
    // Predicated region
    $region2: #{find_forward.1} parent=1 // pred_check
      _
    $region3: #{find_forward.1} parent=1 // pred_check_branch
      %20 = sbr.rel (0) target = $region5
    $region4: #{find_forward.1} parent=1 // pred_region
      _
    $region5: #{find_forward.1} parent=1 // pred_fallthru
      _
    // Predicated region
    $region6: #{find_forward.1} parent=1 // pred_check
      _
    $region7: #{find_forward.1} parent=1 // pred_check_branch
      %22 = sbr.rel (0) target = $region9
    $region8: #{find_forward.1} parent=1 // pred_region
      _
    $region9: #{find_forward.1} parent=1 // pred_fallthru
      _
    // Predicated region
    $region10: #{find_forward.1} parent=1 // pred_check
      _
    $region11: #{find_forward.1} parent=1 // pred_check_branch
      %24 = sbr.rel (0) target = $region13
    $region12: #{find_forward.1} parent=1 // pred_region
      _
    $region13: #{find_forward.1} parent=1 // pred_fallthru
      _
    // Predicated region
    $region14: #{find_forward.1} parent=1 // pred_check
      _
    $region15: #{find_forward.1} parent=1 // pred_check_branch
      %26 = sbr.rel (0) target = $region17
    $region16: #{find_forward.1} parent=1 // pred_region
      _
    $region17: #{find_forward.1} parent=1 // pred_fallthru
      _
    // Predicated region
    $region18: #{find_forward.1} parent=1 // pred_check
      _
    $region19: #{find_forward.1} parent=1 // pred_check_branch
      %28 = sbr.rel (0) target = $region21
    $region20: #{find_forward.1} parent=1 // pred_region
      _
    $region21: #{find_forward.1} parent=1 // pred_fallthru
      _
    // Predicated region
    $region22: #{find_forward.1} parent=1 // pred_check
      _
    $region23: #{find_forward.1} parent=1 // pred_check_branch
      %30 = sbr.rel (0) target = $region25
    $region24: #{find_forward.1} parent=1 // pred_region
      _
    $region25: #{find_forward.1} parent=1 // pred_fallthru
      _
    // Predicated region
    $region26: #{find_forward.1} parent=1 // pred_check
      _
    $region27: #{find_forward.1} parent=1 // pred_check_branch
      %32 = sbr.rel (0) target = $region29
    $region28: #{find_forward.1} parent=1 // pred_region
      _
    $region29: #{find_forward.1} parent=1 // pred_fallthru
      _
    %v33 = vld [vmem:[%s4] sm:$0xff]
    %v34 = vld [vmem:[%s4 + $0x8] sm:$0xff]
    %v35 = vld [vmem:[%s4 + $0x10] sm:$0xff]
    %v36 = vld [vmem:[%s4 + $0x18] sm:$0xff]
    %v37 = vld [vmem:[%s4 + $0x20] sm:$0xff]
    %v38 = vld [vmem:[%s4 + $0x28] sm:$0xff]
    %v39 = vld [vmem:[%s4 + $0x30] sm:$0xff]
    %v40 = vld [vmem:[%s4 + $0x38] sm:$0xff]
    %v41 = vld [vmem:[%s4 + $0x40] sm:$0xff]
    %v42 = vld [vmem:[%s4 + $0x48] sm:$0xff]
    %v43 = vld [vmem:[%s4 + $0x50] sm:$0xff]
    %v44 = vld [vmem:[%s4 + $0x58] sm:$0xff]
    %v45 = vld [vmem:[%s4 + $0x60] sm:$0xff]
    %v46 = vld [vmem:[%s4 + $0x68] sm:$0xff]
    %v47 = vld [vmem:[%s4 + $0x70] sm:$0xff]
    %v48 = vld [vmem:[%s4 + $0x78] sm:$0xff]
    %v49 = vld [vmem:[%s4 + $0x80] sm:$0xff]
    %v50 = vld [vmem:[%s4 + $0x88] sm:$0xff]
    %v51 = vld [vmem:[%s4 + $0x90] sm:$0xff]
    %v52 = vld [vmem:[%s4 + $0x98] sm:$0xff]
    %v53 = vld [vmem:[%s4 + $0xa0] sm:$0xff]
    %v54 = vld [vmem:[%s4 + $0xa8] sm:$0xff]
    %v55 = vld [vmem:[%s4 + $0xb0] sm:$0xff]
    %v56 = vld [vmem:[%s4 + $0xb8] sm:$0xff]
    %v57 = vld [vmem:[%s5] sm:$0xff]
    %v58 = vld [vmem:[%s5 + $0x8] sm:$0xff]
    %v59 = vld [vmem:[%s5 + $0x10] sm:$0xff]
    %v60 = vld [vmem:[%s5 + $0x18] sm:$0xff]
    %v61 = vld [vmem:[%s5 + $0x20] sm:$0xff]
    %v62 = vld [vmem:[%s5 + $0x28] sm:$0xff]
    %v63 = vld [vmem:[%s5 + $0x30] sm:$0xff]
    %v64 = vld [vmem:[%s5 + $0x38] sm:$0xff]
    %v65 = vld [vmem:[%s5 + $0x40] sm:$0xff]
    %v66 = vld [vmem:[%s5 + $0x48] sm:$0xff]
    %v67 = vld [vmem:[%s5 + $0x50] sm:$0xff]
    %v68 = vld [vmem:[%s5 + $0x58] sm:$0xff]
    %v69 = vld [vmem:[%s5 + $0x60] sm:$0xff]
    %v70 = vld [vmem:[%s5 + $0x68] sm:$0xff]
    %v71 = vld [vmem:[%s5 + $0x70] sm:$0xff]
    %v72 = vld [vmem:[%s5 + $0x78] sm:$0xff]
    %v73 = vld [vmem:[%s5 + $0x80] sm:$0xff]
    %v74 = vld [vmem:[%s5 + $0x88] sm:$0xff]
    %v75 = vld [vmem:[%s5 + $0x90] sm:$0xff]
    %v76 = vld [vmem:[%s5 + $0x98] sm:$0xff]
    %v77 = vld [vmem:[%s5 + $0xa0] sm:$0xff]
    %v78 = vld [vmem:[%s5 + $0xa8] sm:$0xff]
    %v79 = vld [vmem:[%s5 + $0xb0] sm:$0xff]
    %v80 = vld [vmem:[%s5 + $0xb8] sm:$0xff]
    %v81 = vld [vmem:[%s5 + $0xc0] sm:$0xff]
    %v82 = vld [vmem:[%s5 + $0xc8] sm:$0xff]
    %v83 = vld [vmem:[%s5 + $0xd0] sm:$0xff]
    %v84 = vld [vmem:[%s5 + $0xd8] sm:$0xff]
    %v85 = vld [vmem:[%s5 + $0xe0] sm:$0xff]
    %v86 = vld [vmem:[%s5 + $0xe8] sm:$0xff]
    %v87 = vld [vmem:[%s5 + $0xf0] sm:$0xff]
    %v88 = vld [vmem:[%s5 + $0xf8] sm:$0xff]
    %v89 = vld [vmem:[%s5 + $0x100] sm:$0xff]
    %v90 = vld [vmem:[%s5 + $0x108] sm:$0xff]
    %v91 = vld [vmem:[%s5 + $0x110] sm:$0xff]
    %v92 = vld [vmem:[%s5 + $0x118] sm:$0xff]
    %v93 = vld [vmem:[%s5 + $0x120] sm:$0xff]
    %v94 = vld [vmem:[%s5 + $0x128] sm:$0xff]
    %v95 = vld [vmem:[%s5 + $0x130] sm:$0xff]
    %v96 = vld [vmem:[%s5 + $0x138] sm:$0xff]
    %v97 = vld [vmem:[%s6] sm:$0x1]
    %v98 = vld [vmem:[%s6 + $0x1] sm:$0x1]
    %v99 = vld [vmem:[%s6 + $0x2] sm:$0x1]
    %v100 = vld [vmem:[%s6 + $0x3] sm:$0x1]
    %v101 = vld [vmem:[%s6 + $0x4] sm:$0x1]
    %v102 = vld [vmem:[%s6 + $0x5] sm:$0x1]
    %v103 = vld [vmem:[%s6 + $0x6] sm:$0x1]
    %v104 = vld [vmem:[%s6 + $0x7] sm:$0x1]
    %v105 = vld [vmem:[%s6 + $0x8] sm:$0x1]
    %v106 = vld [vmem:[%s6 + $0x9] sm:$0x1]
    %v107 = vld [vmem:[%s0] sm:$0xff]
    %v108 = vld [vmem:[%s0 + $0x8] sm:$0xff]
    %v109 = vld [vmem:[%s1] sm:$0xff]
    %v110 = vld [vmem:[%s1 + $0x8] sm:$0xff]
    %v111 = vld [vmem:[%s2] sm:$0xff]
    %v112 = vld [vmem:[%s2 + $0x8] sm:$0xff]
    %v113 = vperm.slane %v97, 0
    %vm114 = vcmask 261120
    %v116 = vsel %vm114, %v107, 0
    %v119 = vsel %vm114, %v108, 0
    %121 = vmatpush.msra.mxu0 0.0
    %122 = vmatpush.msra.mxu0 0.0
    %123 = vmatpush.msra.mxu0 0.0
    %124 = vmatpush.msra.mxu0 0.0
    %125 = vmatpush.msra.mxu0 0.0
    %126 = vmatpush.msra.mxu0 0.0
    %127 = vmatpush.msra.mxu0 0.0
    %128 = vmatpush.msra.mxu0 0.0
    %129 = vmatpush.msra.mxu0 0.0
    %130 = vmatpush.msra.mxu0 0.0
    %131 = vmatpush.msra.mxu0 0.0
    %132 = vmatpush.msra.mxu0 0.0
    %133 = vmatpush.msra.mxu0 %v36
    %134 = vmatpush.msra.mxu0 %v35
    %135 = vmatpush.msra.mxu0 %v34
    %136 = vmatpush.msra.mxu0 %v33
    %137 = vmatmul.f32.gmra.mxu0 %v116
    %v138 = vpop.f32.mrf.mxu0
    %v139 = vadd.f32 %v113, %v138
    %140 = vmatmul.f32.gmra.mxu0 %v119
    %v141 = vpop.f32.mrf.mxu0
    %v142 = vadd.f32 %v113, %v141
    %143 = vdwg.mxu0
    %v144 = vmax.f32 %v139, 0.0
    %v145 = vmax.f32 %v142, 0.0
    %v146 = vperm.slane %v98, 0
    %vm147 = vcmask 523264
    %v149 = vsel %vm147, %v144, 0
    %v152 = vsel %vm147, %v145, 0
    %154 = vmatpush.msra.mxu0 0.0
    %155 = vmatpush.msra.mxu0 0.0
    %156 = vmatpush.msra.mxu0 0.0
    %157 = vmatpush.msra.mxu0 0.0
    %158 = vmatpush.msra.mxu0 0.0
    %159 = vmatpush.msra.mxu0 0.0
    %160 = vmatpush.msra.mxu0 0.0
    %161 = vmatpush.msra.mxu0 0.0
    %162 = vmatpush.msra.mxu0 %v64
    %163 = vmatpush.msra.mxu0 %v63
    %164 = vmatpush.msra.mxu0 %v62
    %165 = vmatpush.msra.mxu0 %v61
    %166 = vmatpush.msra.mxu0 %v60
    %167 = vmatpush.msra.mxu0 %v59
    %168 = vmatpush.msra.mxu0 %v58
    %169 = vmatpush.msra.mxu0 %v57
    %170 = vmatmul.f32.gmra.mxu0 %v149
    %v171 = vpop.f32.mrf.mxu0
    %v172 = vadd.f32 %v146, %v171
    %173 = vmatmul.f32.gmra.mxu0 %v152
    %v174 = vpop.f32.mrf.mxu0
    %v175 = vadd.f32 %v146, %v174
    %176 = vdwg.mxu0
    %v177 = vperm.slane %v99, 0
    %v179 = vsel %vm114, %v109, 0
    %v182 = vsel %vm114, %v110, 0
    %184 = vmatpush.msra.mxu0 0.0
    %185 = vmatpush.msra.mxu0 0.0
    %186 = vmatpush.msra.mxu0 0.0
    %187 = vmatpush.msra.mxu0 0.0
    %188 = vmatpush.msra.mxu0 0.0
    %189 = vmatpush.msra.mxu0 0.0
    %190 = vmatpush.msra.mxu0 0.0
    %191 = vmatpush.msra.mxu0 0.0
    %192 = vmatpush.msra.mxu0 0.0
    %193 = vmatpush.msra.mxu0 0.0
    %194 = vmatpush.msra.mxu0 0.0
    %195 = vmatpush.msra.mxu0 0.0
    %196 = vmatpush.msra.mxu0 %v40
    %197 = vmatpush.msra.mxu0 %v39
    %198 = vmatpush.msra.mxu0 %v38
    %199 = vmatpush.msra.mxu0 %v37
    %200 = vmatmul.f32.gmra.mxu0 %v179
    %v201 = vpop.f32.mrf.mxu0
    %v202 = vadd.f32 %v177, %v201
    %203 = vmatmul.f32.gmra.mxu0 %v182
    %v204 = vpop.f32.mrf.mxu0
    %v205 = vadd.f32 %v177, %v204
    %206 = vdwg.mxu0
    %v207 = vmax.f32 %v202, 0.0
    %v208 = vmax.f32 %v205, 0.0
    %v209 = vperm.slane %v100, 0
    %v211 = vsel %vm147, %v207, 0
    %v214 = vsel %vm147, %v208, 0
    %216 = vmatpush.msra.mxu0 0.0
    %217 = vmatpush.msra.mxu0 0.0
    %218 = vmatpush.msra.mxu0 0.0
    %219 = vmatpush.msra.mxu0 0.0
    %220 = vmatpush.msra.mxu0 0.0
    %221 = vmatpush.msra.mxu0 0.0
    %222 = vmatpush.msra.mxu0 0.0
    %223 = vmatpush.msra.mxu0 0.0
    %224 = vmatpush.msra.mxu0 %v72
    %225 = vmatpush.msra.mxu0 %v71
    %226 = vmatpush.msra.mxu0 %v70
    %227 = vmatpush.msra.mxu0 %v69
    %228 = vmatpush.msra.mxu0 %v68
    %229 = vmatpush.msra.mxu0 %v67
    %230 = vmatpush.msra.mxu0 %v66
    %231 = vmatpush.msra.mxu0 %v65
    %232 = vmatmul.f32.gmra.mxu0 %v211
    %v233 = vpop.f32.mrf.mxu0
    %v234 = vadd.f32 %v209, %v233
    %235 = vmatmul.f32.gmra.mxu0 %v214
    %v236 = vpop.f32.mrf.mxu0
    %v237 = vadd.f32 %v209, %v236
    %238 = vdwg.mxu0
    %v239 = vperm.slane %v101, 0
    %v241 = vsel %vm114, %v111, 0
    %v244 = vsel %vm114, %v112, 0
    %246 = vmatpush.msra.mxu0 0.0
    %247 = vmatpush.msra.mxu0 0.0
    %248 = vmatpush.msra.mxu0 0.0
    %249 = vmatpush.msra.mxu0 0.0
    %250 = vmatpush.msra.mxu0 0.0
    %251 = vmatpush.msra.mxu0 0.0
    %252 = vmatpush.msra.mxu0 0.0
    %253 = vmatpush.msra.mxu0 0.0
    %254 = vmatpush.msra.mxu0 0.0
    %255 = vmatpush.msra.mxu0 0.0
    %256 = vmatpush.msra.mxu0 0.0
    %257 = vmatpush.msra.mxu0 0.0
    %258 = vmatpush.msra.mxu0 %v44
    %259 = vmatpush.msra.mxu0 %v43
    %260 = vmatpush.msra.mxu0 %v42
    %261 = vmatpush.msra.mxu0 %v41
    %262 = vmatmul.f32.gmra.mxu0 %v241
    %v263 = vpop.f32.mrf.mxu0
    %v264 = vadd.f32 %v239, %v263
    %265 = vmatmul.f32.gmra.mxu0 %v244
    %v266 = vpop.f32.mrf.mxu0
    %v267 = vadd.f32 %v239, %v266
    %268 = vdwg.mxu0
    %v269 = vmax.f32 %v264, 0.0
    %v270 = vmax.f32 %v267, 0.0
    %v271 = vperm.slane %v102, 0
    %v273 = vsel %vm147, %v269, 0
    %v276 = vsel %vm147, %v270, 0
    %278 = vmatpush.msra.mxu0 0.0
    %279 = vmatpush.msra.mxu0 0.0
    %280 = vmatpush.msra.mxu0 0.0
    %281 = vmatpush.msra.mxu0 0.0
    %282 = vmatpush.msra.mxu0 0.0
    %283 = vmatpush.msra.mxu0 0.0
    %284 = vmatpush.msra.mxu0 0.0
    %285 = vmatpush.msra.mxu0 0.0
    %286 = vmatpush.msra.mxu0 %v80
    %287 = vmatpush.msra.mxu0 %v79
    %288 = vmatpush.msra.mxu0 %v78
    %289 = vmatpush.msra.mxu0 %v77
    %290 = vmatpush.msra.mxu0 %v76
    %291 = vmatpush.msra.mxu0 %v75
    %292 = vmatpush.msra.mxu0 %v74
    %293 = vmatpush.msra.mxu0 %v73
    %294 = vmatmul.f32.gmra.mxu0 %v273
    %v295 = vpop.f32.mrf.mxu0
    %v296 = vadd.f32 %v271, %v295
    %297 = vmatmul.f32.gmra.mxu0 %v276
    %v298 = vpop.f32.mrf.mxu0
    %v299 = vadd.f32 %v271, %v298
    %300 = vdwg.mxu0
    %v301 = vld [vmem:[%s3] sm:$0x1]
    %v302 = vmul.f32 %v172, %v172
    %v303 = vsel %vm114, %v302, 0.0
    %v304 = vrot.slane %v303, 4
    %v305 = vadd.f32 %v303, %v304
    %v306 = vrot.slane %v305, 2
    %v307 = vadd.f32 %v305, %v306
    %v308 = vrot.slane %v307, 1
    %v309 = vadd.f32 %v307, %v308
    %v310 = vmax.f32 %v309, 1e-24
    %v311 = vrsqrt.pop %v310
    %v312 = vmul.f32 %v311, %v310
    %v313 = vmul.f32 %v312, %v311
    %v314 = vmul.f32 0.5, %v313
    %v315 = vsub.f32 1.5, %v314
    %v316 = vmul.f32 %v311, %v315
    %vm317 = vweird.f32 %v310
    %vm318 = vweird.f32 %v311
    %vm319 = vmor %vm317, %vm318
    %v320 = vsel %vm319, %v311, %v316
    %v321 = vmul.f32 %v172, %v320
    %vm322 = vcmask 523520
    %v323 = vsel %vm322, %v302, 0.0
    %v324 = vrot.slane %v323, 4
    %v325 = vadd.f32 %v323, %v324
    %v326 = vrot.slane %v325, 2
    %v327 = vadd.f32 %v325, %v326
    %v328 = vrot.slane %v327, 1
    %v329 = vadd.f32 %v327, %v328
    %v330 = vmax.f32 %v329, 1e-24
    %v331 = vrsqrt.pop %v330
    %v332 = vmul.f32 %v331, %v330
    %v333 = vmul.f32 %v332, %v331
    %v334 = vmul.f32 0.5, %v333
    %v335 = vsub.f32 1.5, %v334
    %v336 = vmul.f32 %v331, %v335
    %vm337 = vweird.f32 %v330
    %vm338 = vweird.f32 %v331
    %vm339 = vmor %vm337, %vm338
    %v340 = vsel %vm339, %v331, %v336
    %v341 = vmul.f32 %v172, %v340
    %v342 = vmul.f32 %v234, %v234
    %v343 = vsel %vm114, %v342, 0.0
    %v344 = vrot.slane %v343, 4
    %v345 = vadd.f32 %v343, %v344
    %v346 = vrot.slane %v345, 2
    %v347 = vadd.f32 %v345, %v346
    %v348 = vrot.slane %v347, 1
    %v349 = vadd.f32 %v347, %v348
    %v350 = vmax.f32 %v349, 1e-24
    %v351 = vrsqrt.pop %v350
    %v352 = vmul.f32 %v351, %v350
    %v353 = vmul.f32 %v352, %v351
    %v354 = vmul.f32 0.5, %v353
    %v355 = vsub.f32 1.5, %v354
    %v356 = vmul.f32 %v351, %v355
    %vm357 = vweird.f32 %v350
    %vm358 = vweird.f32 %v351
    %vm359 = vmor %vm357, %vm358
    %v360 = vsel %vm359, %v351, %v356
    %v361 = vmul.f32 %v234, %v360
    %v362 = vmul.f32 %v296, %v296
    %v363 = vsel %vm114, %v362, 0.0
    %v364 = vrot.slane %v363, 4
    %v365 = vadd.f32 %v363, %v364
    %v366 = vrot.slane %v365, 2
    %v367 = vadd.f32 %v365, %v366
    %v368 = vrot.slane %v367, 1
    %v369 = vadd.f32 %v367, %v368
    %v370 = vmax.f32 %v369, 1e-24
    %v371 = vrsqrt.pop %v370
    %v372 = vmul.f32 %v371, %v370
    %v373 = vmul.f32 %v372, %v371
    %v374 = vmul.f32 0.5, %v373
    %v375 = vsub.f32 1.5, %v374
    %v376 = vmul.f32 %v371, %v375
    %vm377 = vweird.f32 %v370
    %vm378 = vweird.f32 %v371
    %vm379 = vmor %vm377, %vm378
    %v380 = vsel %vm379, %v371, %v376
    %v381 = vmul.f32 %v296, %v380
    %v383 = vsel %vm114, %v321, 0
    %v386 = vsel %vm114, %v361, 0
    %388 = vmatpush.xpose.msra.mxu0 0.0
    %389 = vmatpush.xpose.msra.mxu0 0.0
    %390 = vmatpush.xpose.msra.mxu0 0.0
    %391 = vmatpush.xpose.msra.mxu0 0.0
    %392 = vmatpush.xpose.msra.mxu0 0.0
    %393 = vmatpush.xpose.msra.mxu0 0.0
    %394 = vmatpush.xpose.msra.mxu0 0.0
    %395 = vmatpush.xpose.msra.mxu0 0.0
    %396 = vmatpush.xpose.msra.mxu0 0.0
    %397 = vmatpush.xpose.msra.mxu0 0.0
    %398 = vmatpush.xpose.msra.mxu0 0.0
    %399 = vmatpush.xpose.msra.mxu0 0.0
    %400 = vmatpush.xpose.msra.mxu0 0.0
    %401 = vmatpush.xpose.msra.mxu0 0.0
    %402 = vmatpush.xpose.msra.mxu0 0.0
    %403 = vmatpush.xpose.msra.mxu0 %v386
    %404 = vmatmul.f32.gmra.mxu0 %v383
    %v405 = vpop.f32.mrf.mxu0
    %v406 = vadd.f32 0.0, %v405
    %407 = vdwg.mxu0
    %v409 = vperm.slane %v301, 0
    %v411 = vmin.f32 %v406, %v409
    %vm412 = vcmask 64512
    %v413 = vsel %vm412, %v411, -inf
    %v414 = vrot.slane %v413, 4
    %v415 = vmax.f32 %v413, %v414
    %v416 = vrot.slane %v415, 2
    %v417 = vmax.f32 %v415, %v416
    %v418 = vrot.slane %v417, 1
    %v419 = vmax.f32 %v417, %v418
    %v420 = vsub.f32 %v411, %v419
    %v421 = vmul.f32 %v420, 1.442695
    %v422 = vpow.pop %v421
    %v423 = vsel %vm412, %v422, 0.0
    %v424 = vrot.slane %v423, 4
    %v425 = vadd.f32 %v423, %v424
    %v426 = vrot.slane %v425, 2
    %v427 = vadd.f32 %v425, %v426
    %v428 = vrot.slane %v427, 1
    %v429 = vadd.f32 %v427, %v428
    %v430 = vrcp.pop %v429
    %v431 = vmul.f32 %v422, %v430
    %v433 = vsel %vm412, %v431, 0
    %435 = vmatpush.msra.mxu0 0.0
    %436 = vmatpush.msra.mxu0 0.0
    %437 = vmatpush.msra.mxu0 0.0
    %438 = vmatpush.msra.mxu0 0.0
    %439 = vmatpush.msra.mxu0 0.0
    %440 = vmatpush.msra.mxu0 0.0
    %441 = vmatpush.msra.mxu0 0.0
    %442 = vmatpush.msra.mxu0 0.0
    %443 = vmatpush.msra.mxu0 0.0
    %444 = vmatpush.msra.mxu0 0.0
    %445 = vmatpush.msra.mxu0 0.0
    %446 = vmatpush.msra.mxu0 0.0
    %447 = vmatpush.msra.mxu0 0.0
    %448 = vmatpush.msra.mxu0 0.0
    %449 = vmatpush.msra.mxu0 0.0
    %450 = vmatpush.msra.mxu0 %v361
    %451 = vmatmul.f32.gmra.mxu0 %v433
    %v452 = vpop.f32.mrf.mxu0
    %v453 = vadd.f32 0.0, %v452
    %454 = vdwg.mxu0
    %456 = vrot.lane.b32.xlu0 %v341, 96
    %v457 = vpop.permute.xlu0 %456
    %v458 = vsel %vm114, %v457, 0
    %v461 = vsel %vm114, %v381, 0
    %463 = vmatpush.xpose.msra.mxu0 0.0
    %464 = vmatpush.xpose.msra.mxu0 0.0
    %465 = vmatpush.xpose.msra.mxu0 0.0
    %466 = vmatpush.xpose.msra.mxu0 0.0
    %467 = vmatpush.xpose.msra.mxu0 0.0
    %468 = vmatpush.xpose.msra.mxu0 0.0
    %469 = vmatpush.xpose.msra.mxu0 0.0
    %470 = vmatpush.xpose.msra.mxu0 0.0
    %471 = vmatpush.xpose.msra.mxu0 0.0
    %472 = vmatpush.xpose.msra.mxu0 0.0
    %473 = vmatpush.xpose.msra.mxu0 0.0
    %474 = vmatpush.xpose.msra.mxu0 0.0
    %475 = vmatpush.xpose.msra.mxu0 0.0
    %476 = vmatpush.xpose.msra.mxu0 0.0
    %477 = vmatpush.xpose.msra.mxu0 0.0
    %478 = vmatpush.xpose.msra.mxu0 %v461
    %479 = vmatmul.f32.gmra.mxu0 %v458
    %v480 = vpop.f32.mrf.mxu0
    %v481 = vadd.f32 0.0, %v480
    %482 = vdwg.mxu0
    %483 = vrot.lane.b32.xlu0 %v409, 120
    %v484 = vpop.permute.xlu0 %483
    %v486 = vmin.f32 %v481, %v484
    %v487 = vsel %vm412, %v486, -inf
    %v488 = vrot.slane %v487, 4
    %v489 = vmax.f32 %v487, %v488
    %v490 = vrot.slane %v489, 2
    %v491 = vmax.f32 %v489, %v490
    %v492 = vrot.slane %v491, 1
    %v493 = vmax.f32 %v491, %v492
    %v494 = vsub.f32 %v486, %v493
    %v495 = vmul.f32 %v494, 1.442695
    %v496 = vpow.pop %v495
    %v497 = vsel %vm412, %v496, 0.0
    %v498 = vrot.slane %v497, 4
    %v499 = vadd.f32 %v497, %v498
    %v500 = vrot.slane %v499, 2
    %v501 = vadd.f32 %v499, %v500
    %v502 = vrot.slane %v501, 1
    %v503 = vadd.f32 %v501, %v502
    %v504 = vrcp.pop %v503
    %v505 = vmul.f32 %v496, %v504
    %v507 = vsel %vm412, %v505, 0
    %509 = vmatpush.msra.mxu0 0.0
    %510 = vmatpush.msra.mxu0 0.0
    %511 = vmatpush.msra.mxu0 0.0
    %512 = vmatpush.msra.mxu0 0.0
    %513 = vmatpush.msra.mxu0 0.0
    %514 = vmatpush.msra.mxu0 0.0
    %515 = vmatpush.msra.mxu0 0.0
    %516 = vmatpush.msra.mxu0 0.0
    %517 = vmatpush.msra.mxu0 0.0
    %518 = vmatpush.msra.mxu0 0.0
    %519 = vmatpush.msra.mxu0 0.0
    %520 = vmatpush.msra.mxu0 0.0
    %521 = vmatpush.msra.mxu0 0.0
    %522 = vmatpush.msra.mxu0 0.0
    %523 = vmatpush.msra.mxu0 0.0
    %524 = vmatpush.msra.mxu0 %v381
    %525 = vmatmul.f32.gmra.mxu0 %v507
    %v526 = vpop.f32.mrf.mxu0
    %v527 = vadd.f32 0.0, %v526
    %528 = vdwg.mxu0
    %s529 = scalar_lea.vmem %s3, 1
    %v530 = vld [vmem:[%s529] sm:$0x1]
    %v531 = vmul.f32 %v175, %v175
    %v532 = vsel %vm114, %v531, 0.0
    %v533 = vrot.slane %v532, 4
    %v534 = vadd.f32 %v532, %v533
    %v535 = vrot.slane %v534, 2
    %v536 = vadd.f32 %v534, %v535
    %v537 = vrot.slane %v536, 1
    %v538 = vadd.f32 %v536, %v537
    %v539 = vmax.f32 %v538, 1e-24
    %v540 = vrsqrt.pop %v539
    %v541 = vmul.f32 %v540, %v539
    %v542 = vmul.f32 %v541, %v540
    %v543 = vmul.f32 0.5, %v542
    %v544 = vsub.f32 1.5, %v543
    %v545 = vmul.f32 %v540, %v544
    %vm546 = vweird.f32 %v539
    %vm547 = vweird.f32 %v540
    %vm548 = vmor %vm546, %vm547
    %v549 = vsel %vm548, %v540, %v545
    %v550 = vmul.f32 %v175, %v549
    %v551 = vsel %vm322, %v531, 0.0
    %v552 = vrot.slane %v551, 4
    %v553 = vadd.f32 %v551, %v552
    %v554 = vrot.slane %v553, 2
    %v555 = vadd.f32 %v553, %v554
    %v556 = vrot.slane %v555, 1
    %v557 = vadd.f32 %v555, %v556
    %v558 = vmax.f32 %v557, 1e-24
    %v559 = vrsqrt.pop %v558
    %v560 = vmul.f32 %v559, %v558
    %v561 = vmul.f32 %v560, %v559
    %v562 = vmul.f32 0.5, %v561
    %v563 = vsub.f32 1.5, %v562
    %v564 = vmul.f32 %v559, %v563
    %vm565 = vweird.f32 %v558
    %vm566 = vweird.f32 %v559
    %vm567 = vmor %vm565, %vm566
    %v568 = vsel %vm567, %v559, %v564
    %v569 = vmul.f32 %v175, %v568
    %v570 = vmul.f32 %v237, %v237
    %v571 = vsel %vm114, %v570, 0.0
    %v572 = vrot.slane %v571, 4
    %v573 = vadd.f32 %v571, %v572
    %v574 = vrot.slane %v573, 2
    %v575 = vadd.f32 %v573, %v574
    %v576 = vrot.slane %v575, 1
    %v577 = vadd.f32 %v575, %v576
    %v578 = vmax.f32 %v577, 1e-24
    %v579 = vrsqrt.pop %v578
    %v580 = vmul.f32 %v579, %v578
    %v581 = vmul.f32 %v580, %v579
    %v582 = vmul.f32 0.5, %v581
    %v583 = vsub.f32 1.5, %v582
    %v584 = vmul.f32 %v579, %v583
    %vm585 = vweird.f32 %v578
    %vm586 = vweird.f32 %v579
    %vm587 = vmor %vm585, %vm586
    %v588 = vsel %vm587, %v579, %v584
    %v589 = vmul.f32 %v237, %v588
    %v590 = vmul.f32 %v299, %v299
    %v591 = vsel %vm114, %v590, 0.0
    %v592 = vrot.slane %v591, 4
    %v593 = vadd.f32 %v591, %v592
    %v594 = vrot.slane %v593, 2
    %v595 = vadd.f32 %v593, %v594
    %v596 = vrot.slane %v595, 1
    %v597 = vadd.f32 %v595, %v596
    %v598 = vmax.f32 %v597, 1e-24
    %v599 = vrsqrt.pop %v598
    %v600 = vmul.f32 %v599, %v598
    %v601 = vmul.f32 %v600, %v599
    %v602 = vmul.f32 0.5, %v601
    %v603 = vsub.f32 1.5, %v602
    %v604 = vmul.f32 %v599, %v603
    %vm605 = vweird.f32 %v598
    %vm606 = vweird.f32 %v599
    %vm607 = vmor %vm605, %vm606
    %v608 = vsel %vm607, %v599, %v604
    %v609 = vmul.f32 %v299, %v608
    %v611 = vsel %vm114, %v550, 0
    %v614 = vsel %vm114, %v589, 0
    %616 = vmatpush.xpose.msra.mxu0 0.0
    %617 = vmatpush.xpose.msra.mxu0 0.0
    %618 = vmatpush.xpose.msra.mxu0 0.0
    %619 = vmatpush.xpose.msra.mxu0 0.0
    %620 = vmatpush.xpose.msra.mxu0 0.0
    %621 = vmatpush.xpose.msra.mxu0 0.0
    %622 = vmatpush.xpose.msra.mxu0 0.0
    %623 = vmatpush.xpose.msra.mxu0 0.0
    %624 = vmatpush.xpose.msra.mxu0 0.0
    %625 = vmatpush.xpose.msra.mxu0 0.0
    %626 = vmatpush.xpose.msra.mxu0 0.0
    %627 = vmatpush.xpose.msra.mxu0 0.0
    %628 = vmatpush.xpose.msra.mxu0 0.0
    %629 = vmatpush.xpose.msra.mxu0 0.0
    %630 = vmatpush.xpose.msra.mxu0 0.0
    %631 = vmatpush.xpose.msra.mxu0 %v614
    %632 = vmatmul.f32.gmra.mxu0 %v611
    %v633 = vpop.f32.mrf.mxu0
    %v634 = vadd.f32 0.0, %v633
    %635 = vdwg.mxu0
    %v637 = vperm.slane %v530, 0
    %v639 = vmin.f32 %v634, %v637
    %v640 = vsel %vm412, %v639, -inf
    %v641 = vrot.slane %v640, 4
    %v642 = vmax.f32 %v640, %v641
    %v643 = vrot.slane %v642, 2
    %v644 = vmax.f32 %v642, %v643
    %v645 = vrot.slane %v644, 1
    %v646 = vmax.f32 %v644, %v645
    %v647 = vsub.f32 %v639, %v646
    %v648 = vmul.f32 %v647, 1.442695
    %v649 = vpow.pop %v648
    %v650 = vsel %vm412, %v649, 0.0
    %v651 = vrot.slane %v650, 4
    %v652 = vadd.f32 %v650, %v651
    %v653 = vrot.slane %v652, 2
    %v654 = vadd.f32 %v652, %v653
    %v655 = vrot.slane %v654, 1
    %v656 = vadd.f32 %v654, %v655
    %v657 = vrcp.pop %v656
    %v658 = vmul.f32 %v649, %v657
    %v660 = vsel %vm412, %v658, 0
    %662 = vmatpush.msra.mxu0 0.0
    %663 = vmatpush.msra.mxu0 0.0
    %664 = vmatpush.msra.mxu0 0.0
    %665 = vmatpush.msra.mxu0 0.0
    %666 = vmatpush.msra.mxu0 0.0
    %667 = vmatpush.msra.mxu0 0.0
    %668 = vmatpush.msra.mxu0 0.0
    %669 = vmatpush.msra.mxu0 0.0
    %670 = vmatpush.msra.mxu0 0.0
    %671 = vmatpush.msra.mxu0 0.0
    %672 = vmatpush.msra.mxu0 0.0
    %673 = vmatpush.msra.mxu0 0.0
    %674 = vmatpush.msra.mxu0 0.0
    %675 = vmatpush.msra.mxu0 0.0
    %676 = vmatpush.msra.mxu0 0.0
    %677 = vmatpush.msra.mxu0 %v589
    %678 = vmatmul.f32.gmra.mxu0 %v660
    %v679 = vpop.f32.mrf.mxu0
    %v680 = vadd.f32 0.0, %v679
    %681 = vdwg.mxu0
    %683 = vrot.lane.b32.xlu0 %v569, 96
    %v684 = vpop.permute.xlu0 %683
    %v685 = vsel %vm114, %v684, 0
    %v688 = vsel %vm114, %v609, 0
    %690 = vmatpush.xpose.msra.mxu0 0.0
    %691 = vmatpush.xpose.msra.mxu0 0.0
    %692 = vmatpush.xpose.msra.mxu0 0.0
    %693 = vmatpush.xpose.msra.mxu0 0.0
    %694 = vmatpush.xpose.msra.mxu0 0.0
    %695 = vmatpush.xpose.msra.mxu0 0.0
    %696 = vmatpush.xpose.msra.mxu0 0.0
    %697 = vmatpush.xpose.msra.mxu0 0.0
    %698 = vmatpush.xpose.msra.mxu0 0.0
    %699 = vmatpush.xpose.msra.mxu0 0.0
    %700 = vmatpush.xpose.msra.mxu0 0.0
    %701 = vmatpush.xpose.msra.mxu0 0.0
    %702 = vmatpush.xpose.msra.mxu0 0.0
    %703 = vmatpush.xpose.msra.mxu0 0.0
    %704 = vmatpush.xpose.msra.mxu0 0.0
    %705 = vmatpush.xpose.msra.mxu0 %v688
    %706 = vmatmul.f32.gmra.mxu0 %v685
    %v707 = vpop.f32.mrf.mxu0
    %v708 = vadd.f32 0.0, %v707
    %709 = vdwg.mxu0
    %710 = vrot.lane.b32.xlu0 %v637, 120
    %v711 = vpop.permute.xlu0 %710
    %v713 = vmin.f32 %v708, %v711
    %v714 = vsel %vm412, %v713, -inf
    %v715 = vrot.slane %v714, 4
    %v716 = vmax.f32 %v714, %v715
    %v717 = vrot.slane %v716, 2
    %v718 = vmax.f32 %v716, %v717
    %v719 = vrot.slane %v718, 1
    %v720 = vmax.f32 %v718, %v719
    %v721 = vsub.f32 %v713, %v720
    %v722 = vmul.f32 %v721, 1.442695
    %v723 = vpow.pop %v722
    %v724 = vsel %vm412, %v723, 0.0
    %v725 = vrot.slane %v724, 4
    %v726 = vadd.f32 %v724, %v725
    %v727 = vrot.slane %v726, 2
    %v728 = vadd.f32 %v726, %v727
    %v729 = vrot.slane %v728, 1
    %v730 = vadd.f32 %v728, %v729
    %v731 = vrcp.pop %v730
    %v732 = vmul.f32 %v723, %v731
    %v734 = vsel %vm412, %v732, 0
    %736 = vmatpush.msra.mxu0 0.0
    %737 = vmatpush.msra.mxu0 0.0
    %738 = vmatpush.msra.mxu0 0.0
    %739 = vmatpush.msra.mxu0 0.0
    %740 = vmatpush.msra.mxu0 0.0
    %741 = vmatpush.msra.mxu0 0.0
    %742 = vmatpush.msra.mxu0 0.0
    %743 = vmatpush.msra.mxu0 0.0
    %744 = vmatpush.msra.mxu0 0.0
    %745 = vmatpush.msra.mxu0 0.0
    %746 = vmatpush.msra.mxu0 0.0
    %747 = vmatpush.msra.mxu0 0.0
    %748 = vmatpush.msra.mxu0 0.0
    %749 = vmatpush.msra.mxu0 0.0
    %750 = vmatpush.msra.mxu0 0.0
    %751 = vmatpush.msra.mxu0 %v609
    %752 = vmatmul.f32.gmra.mxu0 %v734
    %v753 = vpop.f32.mrf.mxu0
    %v754 = vadd.f32 0.0, %v753
    %755 = vdwg.mxu0
    %v756 = vperm.slane %v103, 0
    %757 = vmatpush.msra.mxu0 0.0
    %758 = vmatpush.msra.mxu0 0.0
    %759 = vmatpush.msra.mxu0 0.0
    %760 = vmatpush.msra.mxu0 0.0
    %761 = vmatpush.msra.mxu0 0.0
    %762 = vmatpush.msra.mxu0 0.0
    %763 = vmatpush.msra.mxu0 0.0
    %764 = vmatpush.msra.mxu0 0.0
    %765 = vmatpush.msra.mxu0 0.0
    %766 = vmatpush.msra.mxu0 0.0
    %767 = vmatpush.msra.mxu0 0.0
    %768 = vmatpush.msra.mxu0 0.0
    %769 = vmatpush.msra.mxu0 %v48
    %770 = vmatpush.msra.mxu0 %v47
    %771 = vmatpush.msra.mxu0 %v46
    %772 = vmatpush.msra.mxu0 %v45
    %773 = vmatmul.f32.gmra.mxu0 %v116
    %v774 = vpop.f32.mrf.mxu0
    %v775 = vadd.f32 %v756, %v774
    %776 = vmatmul.f32.gmra.mxu0 %v119
    %v777 = vpop.f32.mrf.mxu0
    %v778 = vadd.f32 %v756, %v777
    %779 = vdwg.mxu0
    %v781 = vsel %vm114, %v527, 0
    %v784 = vsel %vm114, %v754, 0
    %786 = vmatpush.msra.mxu0 0.0
    %787 = vmatpush.msra.mxu0 0.0
    %788 = vmatpush.msra.mxu0 0.0
    %789 = vmatpush.msra.mxu0 0.0
    %790 = vmatpush.msra.mxu0 0.0
    %791 = vmatpush.msra.mxu0 0.0
    %792 = vmatpush.msra.mxu0 0.0
    %793 = vmatpush.msra.mxu0 0.0
    %794 = vmatpush.msra.mxu0 0.0
    %795 = vmatpush.msra.mxu0 0.0
    %796 = vmatpush.msra.mxu0 0.0
    %797 = vmatpush.msra.mxu0 0.0
    %798 = vmatpush.msra.mxu0 %v52
    %799 = vmatpush.msra.mxu0 %v51
    %800 = vmatpush.msra.mxu0 %v50
    %801 = vmatpush.msra.mxu0 %v49
    %802 = vmatmul.f32.gmra.mxu0 %v781
    %v803 = vpop.f32.mrf.mxu0
    %v804 = vadd.f32 0.0, %v803
    %805 = vmatmul.f32.gmra.mxu0 %v784
    %v806 = vpop.f32.mrf.mxu0
    %v807 = vadd.f32 0.0, %v806
    %808 = vdwg.mxu0
    %v809 = vadd.f32 %v775, %v804
    %v810 = vadd.f32 %v778, %v807
    %v811 = vmax.f32 %v809, 0.0
    %v812 = vmax.f32 %v810, 0.0
    %v813 = vperm.slane %v104, 0
    %v815 = vsel %vm147, %v811, 0
    %v818 = vsel %vm147, %v812, 0
    %820 = vmatpush.msra.mxu0 0.0
    %821 = vmatpush.msra.mxu0 0.0
    %822 = vmatpush.msra.mxu0 0.0
    %823 = vmatpush.msra.mxu0 0.0
    %824 = vmatpush.msra.mxu0 0.0
    %825 = vmatpush.msra.mxu0 0.0
    %826 = vmatpush.msra.mxu0 0.0
    %827 = vmatpush.msra.mxu0 0.0
    %828 = vmatpush.msra.mxu0 %v88
    %829 = vmatpush.msra.mxu0 %v87
    %830 = vmatpush.msra.mxu0 %v86
    %831 = vmatpush.msra.mxu0 %v85
    %832 = vmatpush.msra.mxu0 %v84
    %833 = vmatpush.msra.mxu0 %v83
    %834 = vmatpush.msra.mxu0 %v82
    %835 = vmatpush.msra.mxu0 %v81
    %836 = vmatmul.f32.gmra.mxu0 %v815
    %v837 = vpop.f32.mrf.mxu0
    %v838 = vadd.f32 %v813, %v837
    %839 = vmatmul.f32.gmra.mxu0 %v818
    %v840 = vpop.f32.mrf.mxu0
    %v841 = vadd.f32 %v813, %v840
    %842 = vdwg.mxu0
    %845 = vrot.lane.b32.xlu0 %v838, 127
    %v846 = vpop.permute.xlu0 %845
    %847 = vrot.lane.b32.xlu0 %v841, 127
    %v848 = vpop.permute.xlu0 %847
    %v851 = vmax.f32 %v838, %v846
    %v852 = vmax.f32 %v841, %v848
    %v853 = vsub.f32 %v838, %v851
    %v854 = vsub.f32 %v841, %v852
    %v855 = vmul.f32 %v853, 1.442695
    %v856 = vpow.pop %v855
    %v857 = vmul.f32 %v854, 1.442695
    %v858 = vpow.pop %v857
    %861 = vrot.lane.b32.xlu0 %v851, 1
    %v862 = vpop.permute.xlu0 %861
    %863 = vrot.lane.b32.xlu0 %v852, 1
    %v864 = vpop.permute.xlu0 %863
    %v867 = vsub.f32 %v838, %v862
    %v868 = vsub.f32 %v841, %v864
    %v869 = vmul.f32 %v867, 1.442695
    %v870 = vpow.pop %v869
    %v871 = vmul.f32 %v868, 1.442695
    %v872 = vpow.pop %v871
    %875 = vrot.lane.b32.xlu0 %v870, 127
    %v876 = vpop.permute.xlu0 %875
    %877 = vrot.lane.b32.xlu0 %v872, 127
    %v878 = vpop.permute.xlu0 %877
    %v881 = vadd.f32 %v856, %v876
    %v882 = vadd.f32 %v858, %v878
    %v883 = vrcp.pop %v881
    %v884 = vrcp.pop %v882
    %v885 = vmul.f32 %v856, %v883
    %v886 = vmul.f32 %v858, %v884
    %888 = vset.pattern.permute.xlu0 0
    %889 = vperm.xlu0 %888, %v885
    %v890 = vpop.permute.xlu0 %889
    %893 = vset.pattern.permute.xlu0 0
    %894 = vperm.xlu0 %893, %v886
    %v895 = vpop.permute.xlu0 %894
    %v897 = vmul.f32 %v890, %v453
    %v898 = vmul.f32 %v895, %v680
    %901 = vrot.lane.b32.xlu0 %v883, 1
    %v902 = vpop.permute.xlu0 %901
    %903 = vrot.lane.b32.xlu0 %v884, 1
    %v904 = vpop.permute.xlu0 %903
    %v907 = vmul.f32 %v870, %v902
    %v908 = vmul.f32 %v872, %v904
    %910 = vset.pattern.permute.xlu0 1
    %911 = vperm.xlu0 %910, %v907
    %v912 = vpop.permute.xlu0 %911
    %915 = vset.pattern.permute.xlu0 1
    %916 = vperm.xlu0 %915, %v908
    %v917 = vpop.permute.xlu0 %916
    %v919 = vmul.f32 %v912, %v527
    %v920 = vmul.f32 %v917, %v754
    %v921 = vadd.f32 %v897, %v919
    %v922 = vadd.f32 %v898, %v920
    %v923 = vperm.slane %v105, 0
    %v925 = vsel %vm114, %v921, 0
    %v928 = vsel %vm114, %v922, 0
    %930 = vmatpush.msra.mxu0 0.0
    %931 = vmatpush.msra.mxu0 0.0
    %932 = vmatpush.msra.mxu0 0.0
    %933 = vmatpush.msra.mxu0 0.0
    %934 = vmatpush.msra.mxu0 0.0
    %935 = vmatpush.msra.mxu0 0.0
    %936 = vmatpush.msra.mxu0 0.0
    %937 = vmatpush.msra.mxu0 0.0
    %938 = vmatpush.msra.mxu0 0.0
    %939 = vmatpush.msra.mxu0 0.0
    %940 = vmatpush.msra.mxu0 0.0
    %941 = vmatpush.msra.mxu0 0.0
    %942 = vmatpush.msra.mxu0 %v56
    %943 = vmatpush.msra.mxu0 %v55
    %944 = vmatpush.msra.mxu0 %v54
    %945 = vmatpush.msra.mxu0 %v53
    %946 = vmatmul.f32.gmra.mxu0 %v925
    %v947 = vpop.f32.mrf.mxu0
    %v948 = vadd.f32 %v923, %v947
    %949 = vmatmul.f32.gmra.mxu0 %v928
    %v950 = vpop.f32.mrf.mxu0
    %v951 = vadd.f32 %v923, %v950
    %952 = vdwg.mxu0
    %v953 = vmax.f32 %v948, 0.0
    %v954 = vmax.f32 %v951, 0.0
    %v955 = vperm.slane %v106, 0
    %v957 = vsel %vm147, %v953, 0
    %v960 = vsel %vm147, %v954, 0
    %962 = vmatpush.msra.mxu0 0.0
    %963 = vmatpush.msra.mxu0 0.0
    %964 = vmatpush.msra.mxu0 0.0
    %965 = vmatpush.msra.mxu0 0.0
    %966 = vmatpush.msra.mxu0 0.0
    %967 = vmatpush.msra.mxu0 0.0
    %968 = vmatpush.msra.mxu0 0.0
    %969 = vmatpush.msra.mxu0 0.0
    %970 = vmatpush.msra.mxu0 %v96
    %971 = vmatpush.msra.mxu0 %v95
    %972 = vmatpush.msra.mxu0 %v94
    %973 = vmatpush.msra.mxu0 %v93
    %974 = vmatpush.msra.mxu0 %v92
    %975 = vmatpush.msra.mxu0 %v91
    %976 = vmatpush.msra.mxu0 %v90
    %977 = vmatpush.msra.mxu0 %v89
    %978 = vmatmul.f32.gmra.mxu0 %v957
    %v979 = vpop.f32.mrf.mxu0
    %v980 = vadd.f32 %v955, %v979
    %981 = vmatmul.f32.gmra.mxu0 %v960
    %v982 = vpop.f32.mrf.mxu0
    %v983 = vadd.f32 %v955, %v982
    %984 = vdwg.mxu0
    %v985 = vld [vmem:[%s1] sm:$0xff]
    %v986 = vld [vmem:[%s2] sm:$0xff]
    %v987 = vmul.f32 %v980, %v980
    %v988 = vsel %vm114, %v987, 0.0
    %v989 = vrot.slane %v988, 4
    %v990 = vadd.f32 %v988, %v989
    %v991 = vrot.slane %v990, 2
    %v992 = vadd.f32 %v990, %v991
    %v993 = vrot.slane %v992, 1
    %v994 = vadd.f32 %v992, %v993
    %v995 = vmax.f32 %v994, 1e-24
    %v996 = vrsqrt.pop %v995
    %v997 = vmul.f32 %v996, %v995
    %v998 = vmul.f32 %v997, %v996
    %v999 = vmul.f32 0.5, %v998
    %v1000 = vsub.f32 1.5, %v999
    %v1001 = vmul.f32 %v996, %v1000
    %vm1002 = vweird.f32 %v995
    %vm1003 = vweird.f32 %v996
    %vm1004 = vmor %vm1002, %vm1003
    %v1005 = vsel %vm1004, %v996, %v1001
    %v1006 = vmul.f32 %v980, %v1005
    %v1007 = vsel %vm322, %v342, 0.0
    %v1008 = vsel %vm322, %v362, 0.0
    %v1009 = vadd.f32 %v1007, %v1008
    %v1010 = vrot.slane %v1009, 4
    %v1011 = vadd.f32 %v1009, %v1010
    %v1012 = vrot.slane %v1011, 2
    %v1013 = vadd.f32 %v1011, %v1012
    %v1014 = vrot.slane %v1013, 1
    %v1015 = vadd.f32 %v1013, %v1014
    %v1016 = vmax.f32 %v1015, 1e-24
    %v1017 = vrsqrt.pop %v1016
    %v1018 = vmul.f32 %v1017, %v1016
    %v1019 = vmul.f32 %v1018, %v1017
    %v1020 = vmul.f32 0.5, %v1019
    %v1021 = vsub.f32 1.5, %v1020
    %v1022 = vmul.f32 %v1017, %v1021
    %vm1023 = vweird.f32 %v1016
    %vm1024 = vweird.f32 %v1017
    %vm1025 = vmor %vm1023, %vm1024
    %v1026 = vsel %vm1025, %v1017, %v1022
    %v1027 = vmul.f32 %v234, %v1026
    %v1028 = vmul.f32 %v296, %v1026
    %1031 = vrot.lane.b32.xlu0 %v1027, 96
    %v1032 = vpop.permute.xlu0 %1031
    %1033 = vrot.lane.b32.xlu0 %v1028, 96
    %v1034 = vpop.permute.xlu0 %1033
    %v1036 = vsel %vm114, %v1006, 0
    %v1038 = vsel %vm114, %v1032, 0
    %v1040 = vsel %vm114, %v1034, 0
    %1042 = vmatpush.xpose.msra.mxu0 0.0
    %1043 = vmatpush.xpose.msra.mxu0 0.0
    %1044 = vmatpush.xpose.msra.mxu0 0.0
    %1045 = vmatpush.xpose.msra.mxu0 0.0
    %1046 = vmatpush.xpose.msra.mxu0 0.0
    %1047 = vmatpush.xpose.msra.mxu0 0.0
    %1048 = vmatpush.xpose.msra.mxu0 0.0
    %1049 = vmatpush.xpose.msra.mxu0 0.0
    %1050 = vmatpush.xpose.msra.mxu0 0.0
    %1051 = vmatpush.xpose.msra.mxu0 0.0
    %1052 = vmatpush.xpose.msra.mxu0 0.0
    %1053 = vmatpush.xpose.msra.mxu0 0.0
    %1054 = vmatpush.xpose.msra.mxu0 0.0
    %1055 = vmatpush.xpose.msra.mxu0 0.0
    %1056 = vmatpush.xpose.msra.mxu0 %v1040
    %1057 = vmatpush.xpose.msra.mxu0 %v1038
    %1058 = vmatmul.f32.gmra.mxu0 %v1036
    %v1059 = vpop.f32.mrf.mxu0
    %v1060 = vadd.f32 0.0, %v1059
    %1061 = vdwg.mxu0
    %vm1062 = vcmask 130048
    %v1063 = vsel %vm1062, %v1060, -inf
    %1064 = vmax.xlane.f32.xlu0 %v1063
    %v1065 = vpop.xlane.xlu0 %1064
    %v1066 = vsub.f32 %v1060, %v1065
    %v1067 = vmul.f32 %v1066, 1.442695
    %v1068 = vpow.pop %v1067
    %v1069 = vsel %vm1062, %v1068, 0.0
    %1070 = vadd.xlane.f32.xlu0 %v1069
    %v1071 = vpop.xlane.xlu0 %1070
    %v1072 = vrcp.pop %v1071
    %v1073 = vmul.f32 %v1068, %v1072
    %1074 = vst.msk [vmem:[#allocation6] sm:$0xff] %vm1062, %v1073
    %1075 = vst.msk [vmem:[#allocation2] sm:$0xff] %vm412, %v1073
    %1077 = vrot.lane.b32.xlu0 %v1073, 120
    %v1078 = vpop.permute.xlu0 %1077
    %1080 = vst.msk [vmem:[#allocation4] sm:$0xff] %vm412, %v1078
    %v1081 = vsel %vm1062, %v1073, 0
    %1083 = vmatpush.msra.mxu0 0.0
    %1084 = vmatpush.msra.mxu0 0.0
    %1085 = vmatpush.msra.mxu0 0.0
    %1086 = vmatpush.msra.mxu0 0.0
    %1087 = vmatpush.msra.mxu0 0.0
    %1088 = vmatpush.msra.mxu0 0.0
    %1089 = vmatpush.msra.mxu0 0.0
    %1090 = vmatpush.msra.mxu0 0.0
    %1091 = vmatpush.msra.mxu0 0.0
    %1092 = vmatpush.msra.mxu0 0.0
    %1093 = vmatpush.msra.mxu0 0.0
    %1094 = vmatpush.msra.mxu0 0.0
    %1095 = vmatpush.msra.mxu0 0.0
    %1096 = vmatpush.msra.mxu0 0.0
    %1097 = vmatpush.msra.mxu0 %v986
    %1098 = vmatpush.msra.mxu0 %v985
    %1099 = vmatmul.f32.gmra.mxu0 %v1081
    %v1100 = vpop.f32.mrf.mxu0
    %v1101 = vadd.f32 0.0, %v1100
    %1102 = vdwg.mxu0
    %1103 = vst.msk [vmem:[#allocation7] sm:$0xff] %vm114, %v1101
    %s1104 = scalar_lea.vmem %s1, 8
    %v1105 = vld [vmem:[%s1104] sm:$0xff]
    %s1106 = scalar_lea.vmem %s2, 8
    %v1107 = vld [vmem:[%s1106] sm:$0xff]
    %v1108 = vmul.f32 %v983, %v983
    %v1109 = vsel %vm114, %v1108, 0.0
    %v1110 = vrot.slane %v1109, 4
    %v1111 = vadd.f32 %v1109, %v1110
    %v1112 = vrot.slane %v1111, 2
    %v1113 = vadd.f32 %v1111, %v1112
    %v1114 = vrot.slane %v1113, 1
    %v1115 = vadd.f32 %v1113, %v1114
    %v1116 = vmax.f32 %v1115, 1e-24
    %v1117 = vrsqrt.pop %v1116
    %v1118 = vmul.f32 %v1117, %v1116
    %v1119 = vmul.f32 %v1118, %v1117
    %v1120 = vmul.f32 0.5, %v1119
    %v1121 = vsub.f32 1.5, %v1120
    %v1122 = vmul.f32 %v1117, %v1121
    %vm1123 = vweird.f32 %v1116
    %vm1124 = vweird.f32 %v1117
    %vm1125 = vmor %vm1123, %vm1124
    %v1126 = vsel %vm1125, %v1117, %v1122
    %v1127 = vmul.f32 %v983, %v1126
    %v1128 = vsel %vm322, %v570, 0.0
    %v1129 = vsel %vm322, %v590, 0.0
    %v1130 = vadd.f32 %v1128, %v1129
    %v1131 = vrot.slane %v1130, 4
    %v1132 = vadd.f32 %v1130, %v1131
    %v1133 = vrot.slane %v1132, 2
    %v1134 = vadd.f32 %v1132, %v1133
    %v1135 = vrot.slane %v1134, 1
    %v1136 = vadd.f32 %v1134, %v1135
    %v1137 = vmax.f32 %v1136, 1e-24
    %v1138 = vrsqrt.pop %v1137
    %v1139 = vmul.f32 %v1138, %v1137
    %v1140 = vmul.f32 %v1139, %v1138
    %v1141 = vmul.f32 0.5, %v1140
    %v1142 = vsub.f32 1.5, %v1141
    %v1143 = vmul.f32 %v1138, %v1142
    %vm1144 = vweird.f32 %v1137
    %vm1145 = vweird.f32 %v1138
    %vm1146 = vmor %vm1144, %vm1145
    %v1147 = vsel %vm1146, %v1138, %v1143
    %v1148 = vmul.f32 %v237, %v1147
    %v1149 = vmul.f32 %v299, %v1147
    %1152 = vrot.lane.b32.xlu0 %v1148, 96
    %v1153 = vpop.permute.xlu0 %1152
    %1154 = vrot.lane.b32.xlu0 %v1149, 96
    %v1155 = vpop.permute.xlu0 %1154
    %v1157 = vsel %vm114, %v1127, 0
    %v1159 = vsel %vm114, %v1153, 0
    %v1161 = vsel %vm114, %v1155, 0
    %1163 = vmatpush.xpose.msra.mxu0 0.0
    %1164 = vmatpush.xpose.msra.mxu0 0.0
    %1165 = vmatpush.xpose.msra.mxu0 0.0
    %1166 = vmatpush.xpose.msra.mxu0 0.0
    %1167 = vmatpush.xpose.msra.mxu0 0.0
    %1168 = vmatpush.xpose.msra.mxu0 0.0
    %1169 = vmatpush.xpose.msra.mxu0 0.0
    %1170 = vmatpush.xpose.msra.mxu0 0.0
    %1171 = vmatpush.xpose.msra.mxu0 0.0
    %1172 = vmatpush.xpose.msra.mxu0 0.0
    %1173 = vmatpush.xpose.msra.mxu0 0.0
    %1174 = vmatpush.xpose.msra.mxu0 0.0
    %1175 = vmatpush.xpose.msra.mxu0 0.0
    %1176 = vmatpush.xpose.msra.mxu0 0.0
    %1177 = vmatpush.xpose.msra.mxu0 %v1161
    %1178 = vmatpush.xpose.msra.mxu0 %v1159
    %1179 = vmatmul.f32.gmra.mxu0 %v1157
    %v1180 = vpop.f32.mrf.mxu0
    %v1181 = vadd.f32 0.0, %v1180
    %1182 = vdwg.mxu0
    %v1183 = vsel %vm1062, %v1181, -inf
    %1184 = vmax.xlane.f32.xlu0 %v1183
    %v1185 = vpop.xlane.xlu0 %1184
    %v1186 = vsub.f32 %v1181, %v1185
    %v1187 = vmul.f32 %v1186, 1.442695
    %v1188 = vpow.pop %v1187
    %v1189 = vsel %vm1062, %v1188, 0.0
    %1190 = vadd.xlane.f32.xlu0 %v1189
    %v1191 = vpop.xlane.xlu0 %1190
    %v1192 = vrcp.pop %v1191
    %v1193 = vmul.f32 %v1188, %v1192
    %s1194 = scalar_lea.vmem [#allocation6], 8
    %1195 = vst.msk [vmem:[%s1194] sm:$0xff] %vm1062, %v1193
    %s1196 = scalar_lea.vmem [#allocation2], 8
    %1197 = vst.msk [vmem:[%s1196] sm:$0xff] %vm412, %v1193
    %1199 = vrot.lane.b32.xlu0 %v1193, 120
    %v1200 = vpop.permute.xlu0 %1199
    %s1202 = scalar_lea.vmem [#allocation4], 8
    %1203 = vst.msk [vmem:[%s1202] sm:$0xff] %vm412, %v1200
    %v1204 = vsel %vm1062, %v1193, 0
    %1206 = vmatpush.msra.mxu0 0.0
    %1207 = vmatpush.msra.mxu0 0.0
    %1208 = vmatpush.msra.mxu0 0.0
    %1209 = vmatpush.msra.mxu0 0.0
    %1210 = vmatpush.msra.mxu0 0.0
    %1211 = vmatpush.msra.mxu0 0.0
    %1212 = vmatpush.msra.mxu0 0.0
    %1213 = vmatpush.msra.mxu0 0.0
    %1214 = vmatpush.msra.mxu0 0.0
    %1215 = vmatpush.msra.mxu0 0.0
    %1216 = vmatpush.msra.mxu0 0.0
    %1217 = vmatpush.msra.mxu0 0.0
    %1218 = vmatpush.msra.mxu0 0.0
    %1219 = vmatpush.msra.mxu0 0.0
    %1220 = vmatpush.msra.mxu0 %v1107
    %1221 = vmatpush.msra.mxu0 %v1105
    %1222 = vmatmul.f32.gmra.mxu0 %v1204
    %v1223 = vpop.f32.mrf.mxu0
    %v1224 = vadd.f32 0.0, %v1223
    %1225 = vdwg.mxu0
    %s1226 = scalar_lea.vmem [#allocation7], 8
    %1227 = vst.msk [vmem:[%s1226] sm:$0xff] %vm114, %v1224
    // Predicated region
    $region30: #{find_forward.1} parent=1 // pred_check
      _
    $region31: #{find_forward.1} parent=1 // pred_check_branch
      %1229 = sbr.rel (0) target = $region33
    $region32: #{find_forward.1} parent=1 // pred_region
      %1231 = vsyncadd [#allocation3], 0
      %s1232 = sshll.u32 [#allocation2], 4
      %s1233 = int_to_ptr.vmem [resolvable:$true] %s1232
      %s1234 = sshll.u32 %s7, 4
      %s1235 = int_to_ptr.hbm [resolvable:$true] %s1234
      %1240 = dma.vmem_to_hbm [thread:$0]  %s1233, 256, %s1235, [#allocation3], 128, 128, 8
    $region33: #{find_forward.1} parent=1 // pred_fallthru
      _
    // Predicated region
    $region34: #{find_forward.1} parent=1 // pred_check
      _
    $region35: #{find_forward.1} parent=1 // pred_check_branch
      %1242 = sbr.rel (0) target = $region37
    $region36: #{find_forward.1} parent=1 // pred_region
      %1244 = vsyncadd [#allocation5], 0
      %s1245 = sshll.u32 [#allocation4], 4
      %s1246 = int_to_ptr.vmem [resolvable:$true] %s1245
      %s1247 = sshll.u32 %s8, 4
      %s1248 = int_to_ptr.hbm [resolvable:$true] %s1247
      %1253 = dma.vmem_to_hbm [thread:$0]  %s1246, 256, %s1248, [#allocation5], 128, 128, 8
    $region37: #{find_forward.1} parent=1 // pred_fallthru
      _
    // Predicated region
    $region38: #{find_forward.1} parent=1 // pred_check
      _
    $region39: #{find_forward.1} parent=1 // pred_check_branch
      %1255 = sbr.rel (0) target = $region41
    $region40: #{find_forward.1} parent=1 // pred_region
      %1257 = vsyncadd [#allocation5], 0
      %s1258 = sshll.u32 [#allocation6], 4
      %s1259 = int_to_ptr.vmem [resolvable:$true] %s1258
      %s1260 = sshll.u32 %s9, 4
      %s1261 = int_to_ptr.hbm [resolvable:$true] %s1260
      %1266 = dma.vmem_to_hbm [thread:$0]  %s1259, 256, %s1261, [#allocation5], 128, 128, 8
    $region41: #{find_forward.1} parent=1 // pred_fallthru
      _
    // Predicated region
    $region42: #{find_forward.1} parent=1 // pred_check
      _
    $region43: #{find_forward.1} parent=1 // pred_check_branch
      %1268 = sbr.rel (0) target = $region45
    $region44: #{find_forward.1} parent=1 // pred_region
      %1270 = vsyncadd [#allocation8], 0
      %s1271 = sshll.u32 [#allocation7], 4
      %s1272 = int_to_ptr.vmem [resolvable:$true] %s1271
      %s1273 = sshll.u32 %s10, 4
      %s1274 = int_to_ptr.hbm [resolvable:$true] %s1273
      %1279 = dma.vmem_to_hbm [thread:$0]  %s1272, 256, %s1274, [#allocation8], 128, 128, 8
    $region45: #{find_forward.1} parent=1 // pred_fallthru
      _
    // Predicated region
    $region46: #{find_forward.1} parent=1 // pred_check
      _
    $region47: #{find_forward.1} parent=1 // pred_check_branch
      %1281 = sbr.rel (0) target = $region49
    $region48: #{find_forward.1} parent=1 // pred_region
      %1283 = dma.done [#allocation3], 256
    $region49: #{find_forward.1} parent=1 // pred_fallthru
      _
    // Predicated region
    $region50: #{find_forward.1} parent=1 // pred_check
      _
    $region51: #{find_forward.1} parent=1 // pred_check_branch
      %1285 = sbr.rel (0) target = $region53
    $region52: #{find_forward.1} parent=1 // pred_region
      %1287 = dma.done [#allocation5], 256
    $region53: #{find_forward.1} parent=1 // pred_fallthru
      _
    // Predicated region
    $region54: #{find_forward.1} parent=1 // pred_check
      _
    $region55: #{find_forward.1} parent=1 // pred_check_branch
      %1289 = sbr.rel (0) target = $region57
    $region56: #{find_forward.1} parent=1 // pred_region
      %1291 = dma.done [#allocation5], 256
    $region57: #{find_forward.1} parent=1 // pred_fallthru
      _
    // Predicated region
    $region58: #{find_forward.1} parent=1 // pred_check
      _
    $region59: #{find_forward.1} parent=1 // pred_check_branch
      %1293 = sbr.rel (0) target = $region61
    $region60: #{find_forward.1} parent=1 // pred_region
      %1295 = dma.done [#allocation8], 256
    $region61: #{find_forward.1} parent=1 // pred_fallthru
      _
    %1296 = vsyncpa [#allocation3], 1
    %1297 = vsyncpa [#allocation5], 1
    %1298 = vsyncpa [#allocation8], 1

</llo_original>
